<compile_context>
chip_gen: v6e
topology: v6e:2x2x1
jax: 0.10.0
libtpu: 0.0.40
codegen_flags: <defaults>
</compile_context>

<pallas_src>
import functools

import jax
import jax.numpy as jnp
from jax import lax
from jax.experimental import pallas as pl
from jax.experimental.pallas import tpu as pltpu

_LANE = 128
_BN_EPS = 1e-5


def _round_up(x, m):
    return (x + m - 1) // m * m


def _choose_b_tile(n, h, w, cout_pad):
    """Batch elements per grid step, sized against a conservative VMEM budget."""
    act_bytes_per_b = h * w * cout_pad * 4            # f32 conv activation per element
    budget = 8 * 1024 * 1024                          # headroom vs 32 MiB scoped / 64 MiB v7x
    bt = max(1, min(n, budget // max(act_bytes_per_b, 1)))
    if n > 1:                                         # keep >= 2 grid steps (v7x megacore)
        bt = min(bt, max(1, (n + 1) // 2))
    return bt


# ----------------------------------------------------------------------------
# Pallas kernel: conv(9 shifted matmuls) + folded-BN bias + ReLU + GAP + Linear
# ----------------------------------------------------------------------------
def _cnn_fused_kernel(x_ref,      # (B_TILE, H+2, W+2, Cin)  bf16, spatially padded NHWC
                      wconv_ref,  # (9, Cin, COUT_PAD)       bf16, BN folded in
                      bias_ref,   # (2, CPAD)                f32: [0]=conv+BN bias, [1]=fc bias
                      wfc_ref,    # (COUT_PAD, F_PAD)        bf16
                      o_ref,      # (1, B_TILE, F_PAD)       f32
                      *, h, w, cout_pad, f_pad):
    b, _, _, cin = x_ref.shape
    hw = h * w

    # Load the tile once and upcast; the shifted-window slicing below then
    # happens on an unpacked f32 value (arbitrary sublane offsets are cheap).
    x = x_ref[...].astype(jnp.float32)                          # (B, H+2, W+2, Cin)

    # 3x3 conv (pad=1) as 9 accumulated matmuls over shifted windows.
    acc = jnp.zeros((b * hw, cout_pad), jnp.float32)
    for t in range(9):
        i, j = divmod(t, 3)
        tap = x[:, i:i + h, j:j + w, :].reshape(b * hw, cin)    # (B*HW, Cin)
        acc = acc + jnp.dot(tap.astype(jnp.bfloat16), wconv_ref[t],
                            preferred_element_type=jnp.float32)

    # Folded conv-bias + BatchNorm(eval) shift, then ReLU.
    y = jnp.maximum(acc + bias_ref[0:1, 0:cout_pad], 0.0)       # (B*HW, COUT_PAD)

    # AdaptiveAvgPool2d((1,1)) == mean over the true H*W spatial positions.
    pooled = jnp.mean(y.reshape(b, hw, cout_pad), axis=1)       # (B, COUT_PAD)

    # Task head: one batched Linear matmul for the whole tile.
    logits = jnp.dot(pooled.astype(jnp.bfloat16), wfc_ref[...],
                     preferred_element_type=jnp.float32)
    logits = logits + bias_ref[1:2, 0:f_pad]                    # (B, F_PAD)

    o_ref[0] = logits.astype(o_ref.dtype)


# ----------------------------------------------------------------------------
# Wrapper: layout prep, BN folding, lane padding, pallas_call
# ----------------------------------------------------------------------------
def cnn_base_forward(x_nchw, params, *, b_tile=None):
    """Forward matching CnnBase.forward: features -> avgpool -> flatten -> task."""
    n, cin, h, w = x_nchw.shape
    conv_w = params["conv_w"]                 # (Cout, Cin, 3, 3)  PyTorch layout
    cout = conv_w.shape[0]
    fc_w = params["fc_w"]                     # (F, Cout)          PyTorch layout
    f = fc_w.shape[0]

    cout_pad = _round_up(cout, _LANE)
    f_pad = _round_up(f, _LANE)
    cpad = max(cout_pad, f_pad)

    # --- fold BatchNorm(eval) + conv bias into the conv weights (exact, f32) ---
    scale = params["bn_gamma"] * lax.rsqrt(params["bn_var"] + _BN_EPS)     # (Cout,)
    w_fold = conv_w * scale[:, None, None, None]
    b_fold = (params["conv_b"] - params["bn_mean"]) * scale + params["bn_beta"]

    # (Cout,Cin,3,3) -> (3,3,Cin,Cout) -> (9,Cin,Cout_pad), bf16 MXU operand.
    wk = jnp.transpose(w_fold, (2, 3, 1, 0)).reshape(9, cin, cout)
    wk = jnp.pad(wk, ((0, 0), (0, 0), (0, cout_pad - cout))).astype(jnp.bfloat16)

    # Task Linear: (F,Cout) -> (Cout_pad, F_pad), bf16, zero padded.
    wfc = jnp.zeros((cout_pad, f_pad), jnp.float32).at[:cout, :f].set(fc_w.T)
    wfc = wfc.astype(jnp.bfloat16)

    # Pack the two per-channel bias vectors into a single small f32 input.
    bias_pack = jnp.zeros((2, cpad), jnp.float32)
    bias_pack = bias_pack.at[0, :cout].set(b_fold)
    bias_pack = bias_pack.at[1, :f].set(params["fc_b"])

    # --- batch tiling ---
    if b_tile is None:
        b_tile = _choose_b_tile(n, h, w, cout_pad)
    n_pad = _round_up(n, b_tile)
    num_steps = n_pad // b_tile

    # NCHW -> NHWC, spatial pad=1, bf16 (halves HBM read traffic).
    x_nhwc = jnp.transpose(x_nchw, (0, 2, 3, 1))
    x_pad = jnp.pad(x_nhwc, ((0, n_pad - n), (1, 1), (1, 1), (0, 0)))
    x_pad = x_pad.astype(jnp.bfloat16)
    hp, wp = h + 2, w + 2

    grid_spec = pltpu.PrefetchScalarGridSpec(
        num_scalar_prefetch=0,
        grid=(num_steps,),
        in_specs=[
            pl.BlockSpec((b_tile, hp, wp, cin), lambda s: (s, 0, 0, 0)),  # input tile
            pl.BlockSpec((9, cin, cout_pad), lambda s: (0, 0, 0)),        # folded conv w
            pl.BlockSpec((2, cpad), lambda s: (0, 0)),                    # packed biases
            pl.BlockSpec((cout_pad, f_pad), lambda s: (0, 0)),            # fc weights
        ],
        out_specs=pl.BlockSpec((1, b_tile, f_pad), lambda s: (s, 0, 0)),
    )

    out = pl.pallas_call(
        functools.partial(_cnn_fused_kernel, h=h, w=w,
                          cout_pad=cout_pad, f_pad=f_pad),
        out_shape=jax.ShapeDtypeStruct((num_steps, b_tile, f_pad), jnp.float32),
        grid_spec=grid_spec,
        compiler_params=pltpu.CompilerParams(
            dimension_semantics=("parallel",),
            vmem_limit_bytes=32 * 1024 * 1024),
    )(x_pad, wk, bias_pack, wfc)

    return out.reshape(n_pad, f_pad)[:n, :f]                     # (N, F)


# ----------------------------------------------------------------------------
# Pure-JAX f32 reference (independent path: lax.conv, unfolded BN)
# ----------------------------------------------------------------------------
def reference_forward(x_nchw, params):
    x_nhwc = jnp.transpose(x_nchw, (0, 2, 3, 1))
    w_hwio = jnp.transpose(params["conv_w"], (2, 3, 1, 0))
    y = lax.conv_general_dilated(
        x_nhwc, w_hwio, window_strides=(1, 1), padding="SAME",
        dimension_numbers=("NHWC", "HWIO", "NHWC"))
    y = y + params["conv_b"]
    inv_std = lax.rsqrt(params["bn_var"] + _BN_EPS)
    y = (y - params["bn_mean"]) * inv_std * params["bn_gamma"] + params["bn_beta"]
    y = jnp.maximum(y, 0.0)
    pooled = jnp.mean(y, axis=(1, 2))                 # AdaptiveAvgPool2d((1,1)) + flatten
    return pooled @ params["fc_w"].T + params["fc_b"]


# ----------------------------------------------------------------------------
# Deterministic parameters (mirrors _initilize_weights_for_layer)
# ----------------------------------------------------------------------------
def make_params(key, cin, cout, num_features):
    k_conv, k_fc, k_mean, k_var = jax.random.split(key, 4)
    # Conv2d: kaiming_normal_(mode='fan_out', nonlinearity='relu'), bias = 0
    std_conv = (2.0 / (cout * 3 * 3)) ** 0.5
    conv_w = std_conv * jax.random.normal(k_conv, (cout, cin, 3, 3), jnp.float32)
    conv_b = jnp.zeros((cout,), jnp.float32)
    # BatchNorm2d: weight = 1, bias = 0; non-trivial running stats to exercise eval math
    bn_gamma = jnp.ones((cout,), jnp.float32)
    bn_beta = jnp.zeros((cout,), jnp.float32)
    bn_mean = 0.1 * jax.random.normal(k_mean, (cout,), jnp.float32)
    bn_var = 1.0 + 0.2 * jax.random.uniform(k_var, (cout,), jnp.float32)
    # Linear: normal_(0, 0.01), bias = 0 (PyTorch weight layout (F, Cout))
    fc_w = 0.01 * jax.random.normal(k_fc, (num_features, cout), jnp.float32)
    fc_b = jnp.zeros((num_features,), jnp.float32)
    return dict(conv_w=conv_w, conv_b=conv_b, bn_gamma=bn_gamma, bn_beta=bn_beta,
                bn_mean=bn_mean, bn_var=bn_var, fc_w=fc_w, fc_b=fc_b)


if __name__ == "__main__":
    key = jax.random.PRNGKey(0)
    k_x, k_p = jax.random.split(key)

    N, Cin, H, W = 2, 4, 16, 16
    Cout, num_of_features = 8, 10

    x = jax.random.normal(k_x, (N, Cin, H, W), jnp.float32)      # NCHW like PyTorch
    params = make_params(k_p, Cin, Cout, num_of_features)

    out = jax.block_until_ready(cnn_base_forward(x, params))
    ref = jax.block_until_ready(reference_forward(x, params))

    assert out.shape == (N, num_of_features)
    max_err = jnp.max(jnp.abs(out - ref))
    assert jnp.allclose(out, ref, atol=5e-3, rtol=5e-2), f"mismatch vs ref (max abs err {max_err})"

    print("KERNEL_OK")
</pallas_src>

<mosaic_0001>
module attributes {stable_mosaic.version = 11 : i64} {
  func.func @_cnn_fused_kernel(%arg0: i32, %arg1: memref<1x18x18x4xbf16, #tpu.memory_space<vmem>>, %arg2: memref<9x4x128xbf16, #tpu.memory_space<vmem>>, %arg3: memref<2x128xf32, #tpu.memory_space<vmem>>, %arg4: memref<128x128xbf16, #tpu.memory_space<vmem>>, %arg5: memref<1x1x128xf32, #tpu.memory_space<vmem>>) attributes {dimension_semantics = [#tpu.dimension_semantics<parallel>], iteration_bounds = array<i64: 2>, scalar_prefetch = 0 : i64, scratch_operands = 0 : i64, tpu.core_type = #tpu.core_type<tc>, window_params = [{transform_indices = @transform_0, window_bounds = array<i64: 1, 18, 18, 4>}, {pipeline_mode = #tpu.pipeline_mode<synchronous>, transform_indices = @transform_1, window_bounds = array<i64: 9, 4, 128>}, {pipeline_mode = #tpu.pipeline_mode<synchronous>, transform_indices = @transform_2, window_bounds = array<i64: 2, 128>}, {pipeline_mode = #tpu.pipeline_mode<synchronous>, transform_indices = @transform_3, window_bounds = array<i64: 128, 128>}, {transform_indices = @transform_4, window_bounds = array<i64: 1, 1, 128>}]} {
    %c0 = arith.constant 0 : index
    %c0_0 = arith.constant 0 : index
    %c0_1 = arith.constant 0 : index
    %c0_2 = arith.constant 0 : index
    %0 = vector.load %arg1[%c0, %c0_0, %c0_1, %c0_2] : memref<1x18x18x4xbf16, #tpu.memory_space<vmem>>, vector<1x18x18x4xbf16>
    %1 = arith.extf %0 : vector<1x18x18x4xbf16> to vector<1x18x18x4xf32>
    %cst = arith.constant 0.000000e+00 : f32
    %2 = vector.broadcast %cst : f32 to vector<256x128xf32>
    %3 = vector.extract_strided_slice %1 {offsets = [0, 0, 0, 0], sizes = [1, 16, 16, 4], strides = [1, 1, 1, 1]} : vector<1x18x18x4xf32> to vector<1x16x16x4xf32>
    %4 = vector.shape_cast %3 : vector<1x16x16x4xf32> to vector<256x4xf32>
    %5 = arith.truncf %4 : vector<256x4xf32> to vector<256x4xbf16>
    %c0_3 = arith.constant 0 : index
    %c0_4 = arith.constant 0 : index
    %c0_5 = arith.constant 0 : index
    %6 = vector.load %arg2[%c0_3, %c0_4, %c0_5] : memref<9x4x128xbf16, #tpu.memory_space<vmem>>, vector<1x4x128xbf16>
    %7 = vector.shape_cast %6 : vector<1x4x128xbf16> to vector<4x128xbf16>
    %cst_6 = arith.constant dense<0.000000e+00> : vector<256x128xf32>
    %8 = tpu.matmul %5, %7, %cst_6 {dimension_numbers = #tpu.dot_dimension_numbers<[1], [0], [0], [1], [0, 0, 1, 1], [], []>} : vector<256x4xbf16>, vector<4x128xbf16>, vector<256x128xf32> -> vector<256x128xf32>
    %9 = arith.addf %2, %8 : vector<256x128xf32>
    %10 = vector.extract_strided_slice %1 {offsets = [0, 0, 1, 0], sizes = [1, 16, 16, 4], strides = [1, 1, 1, 1]} : vector<1x18x18x4xf32> to vector<1x16x16x4xf32>
    %11 = vector.shape_cast %10 : vector<1x16x16x4xf32> to vector<256x4xf32>
    %12 = arith.truncf %11 : vector<256x4xf32> to vector<256x4xbf16>
    %c1 = arith.constant 1 : index
    %c0_7 = arith.constant 0 : index
    %c0_8 = arith.constant 0 : index
    %13 = vector.load %arg2[%c1, %c0_7, %c0_8] : memref<9x4x128xbf16, #tpu.memory_space<vmem>>, vector<1x4x128xbf16>
    %14 = vector.shape_cast %13 : vector<1x4x128xbf16> to vector<4x128xbf16>
    %cst_9 = arith.constant dense<0.000000e+00> : vector<256x128xf32>
    %15 = tpu.matmul %12, %14, %cst_9 {dimension_numbers = #tpu.dot_dimension_numbers<[1], [0], [0], [1], [0, 0, 1, 1], [], []>} : vector<256x4xbf16>, vector<4x128xbf16>, vector<256x128xf32> -> vector<256x128xf32>
    %16 = arith.addf %9, %15 : vector<256x128xf32>
    %17 = vector.extract_strided_slice %1 {offsets = [0, 0, 2, 0], sizes = [1, 16, 16, 4], strides = [1, 1, 1, 1]} : vector<1x18x18x4xf32> to vector<1x16x16x4xf32>
    %18 = vector.shape_cast %17 : vector<1x16x16x4xf32> to vector<256x4xf32>
    %19 = arith.truncf %18 : vector<256x4xf32> to vector<256x4xbf16>
    %c2 = arith.constant 2 : index
    %c0_10 = arith.constant 0 : index
    %c0_11 = arith.constant 0 : index
    %20 = vector.load %arg2[%c2, %c0_10, %c0_11] : memref<9x4x128xbf16, #tpu.memory_space<vmem>>, vector<1x4x128xbf16>
    %21 = vector.shape_cast %20 : vector<1x4x128xbf16> to vector<4x128xbf16>
    %cst_12 = arith.constant dense<0.000000e+00> : vector<256x128xf32>
    %22 = tpu.matmul %19, %21, %cst_12 {dimension_numbers = #tpu.dot_dimension_numbers<[1], [0], [0], [1], [0, 0, 1, 1], [], []>} : vector<256x4xbf16>, vector<4x128xbf16>, vector<256x128xf32> -> vector<256x128xf32>
    %23 = arith.addf %16, %22 : vector<256x128xf32>
    %24 = vector.extract_strided_slice %1 {offsets = [0, 1, 0, 0], sizes = [1, 16, 16, 4], strides = [1, 1, 1, 1]} : vector<1x18x18x4xf32> to vector<1x16x16x4xf32>
    %25 = vector.shape_cast %24 : vector<1x16x16x4xf32> to vector<256x4xf32>
    %26 = arith.truncf %25 : vector<256x4xf32> to vector<256x4xbf16>
    %c3 = arith.constant 3 : index
    %c0_13 = arith.constant 0 : index
    %c0_14 = arith.constant 0 : index
    %27 = vector.load %arg2[%c3, %c0_13, %c0_14] : memref<9x4x128xbf16, #tpu.memory_space<vmem>>, vector<1x4x128xbf16>
    %28 = vector.shape_cast %27 : vector<1x4x128xbf16> to vector<4x128xbf16>
    %cst_15 = arith.constant dense<0.000000e+00> : vector<256x128xf32>
    %29 = tpu.matmul %26, %28, %cst_15 {dimension_numbers = #tpu.dot_dimension_numbers<[1], [0], [0], [1], [0, 0, 1, 1], [], []>} : vector<256x4xbf16>, vector<4x128xbf16>, vector<256x128xf32> -> vector<256x128xf32>
    %30 = arith.addf %23, %29 : vector<256x128xf32>
    %31 = vector.extract_strided_slice %1 {offsets = [0, 1, 1, 0], sizes = [1, 16, 16, 4], strides = [1, 1, 1, 1]} : vector<1x18x18x4xf32> to vector<1x16x16x4xf32>
    %32 = vector.shape_cast %31 : vector<1x16x16x4xf32> to vector<256x4xf32>
    %33 = arith.truncf %32 : vector<256x4xf32> to vector<256x4xbf16>
    %c4 = arith.constant 4 : index
    %c0_16 = arith.constant 0 : index
    %c0_17 = arith.constant 0 : index
    %34 = vector.load %arg2[%c4, %c0_16, %c0_17] : memref<9x4x128xbf16, #tpu.memory_space<vmem>>, vector<1x4x128xbf16>
    %35 = vector.shape_cast %34 : vector<1x4x128xbf16> to vector<4x128xbf16>
    %cst_18 = arith.constant dense<0.000000e+00> : vector<256x128xf32>
    %36 = tpu.matmul %33, %35, %cst_18 {dimension_numbers = #tpu.dot_dimension_numbers<[1], [0], [0], [1], [0, 0, 1, 1], [], []>} : vector<256x4xbf16>, vector<4x128xbf16>, vector<256x128xf32> -> vector<256x128xf32>
    %37 = arith.addf %30, %36 : vector<256x128xf32>
    %38 = vector.extract_strided_slice %1 {offsets = [0, 1, 2, 0], sizes = [1, 16, 16, 4], strides = [1, 1, 1, 1]} : vector<1x18x18x4xf32> to vector<1x16x16x4xf32>
    %39 = vector.shape_cast %38 : vector<1x16x16x4xf32> to vector<256x4xf32>
    %40 = arith.truncf %39 : vector<256x4xf32> to vector<256x4xbf16>
    %c5 = arith.constant 5 : index
    %c0_19 = arith.constant 0 : index
    %c0_20 = arith.constant 0 : index
    %41 = vector.load %arg2[%c5, %c0_19, %c0_20] : memref<9x4x128xbf16, #tpu.memory_space<vmem>>, vector<1x4x128xbf16>
    %42 = vector.shape_cast %41 : vector<1x4x128xbf16> to vector<4x128xbf16>
    %cst_21 = arith.constant dense<0.000000e+00> : vector<256x128xf32>
    %43 = tpu.matmul %40, %42, %cst_21 {dimension_numbers = #tpu.dot_dimension_numbers<[1], [0], [0], [1], [0, 0, 1, 1], [], []>} : vector<256x4xbf16>, vector<4x128xbf16>, vector<256x128xf32> -> vector<256x128xf32>
    %44 = arith.addf %37, %43 : vector<256x128xf32>
    %45 = vector.extract_strided_slice %1 {offsets = [0, 2, 0, 0], sizes = [1, 16, 16, 4], strides = [1, 1, 1, 1]} : vector<1x18x18x4xf32> to vector<1x16x16x4xf32>
    %46 = vector.shape_cast %45 : vector<1x16x16x4xf32> to vector<256x4xf32>
    %47 = arith.truncf %46 : vector<256x4xf32> to vector<256x4xbf16>
    %c6 = arith.constant 6 : index
    %c0_22 = arith.constant 0 : index
    %c0_23 = arith.constant 0 : index
    %48 = vector.load %arg2[%c6, %c0_22, %c0_23] : memref<9x4x128xbf16, #tpu.memory_space<vmem>>, vector<1x4x128xbf16>
    %49 = vector.shape_cast %48 : vector<1x4x128xbf16> to vector<4x128xbf16>
    %cst_24 = arith.constant dense<0.000000e+00> : vector<256x128xf32>
    %50 = tpu.matmul %47, %49, %cst_24 {dimension_numbers = #tpu.dot_dimension_numbers<[1], [0], [0], [1], [0, 0, 1, 1], [], []>} : vector<256x4xbf16>, vector<4x128xbf16>, vector<256x128xf32> -> vector<256x128xf32>
    %51 = arith.addf %44, %50 : vector<256x128xf32>
    %52 = vector.extract_strided_slice %1 {offsets = [0, 2, 1, 0], sizes = [1, 16, 16, 4], strides = [1, 1, 1, 1]} : vector<1x18x18x4xf32> to vector<1x16x16x4xf32>
    %53 = vector.shape_cast %52 : vector<1x16x16x4xf32> to vector<256x4xf32>
    %54 = arith.truncf %53 : vector<256x4xf32> to vector<256x4xbf16>
    %c7 = arith.constant 7 : index
    %c0_25 = arith.constant 0 : index
    %c0_26 = arith.constant 0 : index
    %55 = vector.load %arg2[%c7, %c0_25, %c0_26] : memref<9x4x128xbf16, #tpu.memory_space<vmem>>, vector<1x4x128xbf16>
    %56 = vector.shape_cast %55 : vector<1x4x128xbf16> to vector<4x128xbf16>
    %cst_27 = arith.constant dense<0.000000e+00> : vector<256x128xf32>
    %57 = tpu.matmul %54, %56, %cst_27 {dimension_numbers = #tpu.dot_dimension_numbers<[1], [0], [0], [1], [0, 0, 1, 1], [], []>} : vector<256x4xbf16>, vector<4x128xbf16>, vector<256x128xf32> -> vector<256x128xf32>
    %58 = arith.addf %51, %57 : vector<256x128xf32>
    %59 = vector.extract_strided_slice %1 {offsets = [0, 2, 2, 0], sizes = [1, 16, 16, 4], strides = [1, 1, 1, 1]} : vector<1x18x18x4xf32> to vector<1x16x16x4xf32>
    %60 = vector.shape_cast %59 : vector<1x16x16x4xf32> to vector<256x4xf32>
    %61 = arith.truncf %60 : vector<256x4xf32> to vector<256x4xbf16>
    %c8 = arith.constant 8 : index
    %c0_28 = arith.constant 0 : index
    %c0_29 = arith.constant 0 : index
    %62 = vector.load %arg2[%c8, %c0_28, %c0_29] : memref<9x4x128xbf16, #tpu.memory_space<vmem>>, vector<1x4x128xbf16>
    %63 = vector.shape_cast %62 : vector<1x4x128xbf16> to vector<4x128xbf16>
    %cst_30 = arith.constant dense<0.000000e+00> : vector<256x128xf32>
    %64 = tpu.matmul %61, %63, %cst_30 {dimension_numbers = #tpu.dot_dimension_numbers<[1], [0], [0], [1], [0, 0, 1, 1], [], []>} : vector<256x4xbf16>, vector<4x128xbf16>, vector<256x128xf32> -> vector<256x128xf32>
    %65 = arith.addf %58, %64 : vector<256x128xf32>
    %c0_31 = arith.constant 0 : index
    %c0_32 = arith.constant 0 : index
    %66 = vector.load %arg3[%c0_31, %c0_32] : memref<2x128xf32, #tpu.memory_space<vmem>>, vector<1x128xf32>
    %67 = vector.broadcast %66 : vector<1x128xf32> to vector<256x128xf32>
    %68 = arith.addf %65, %67 : vector<256x128xf32>
    %cst_33 = arith.constant 0.000000e+00 : f32
    %69 = vector.broadcast %cst_33 : f32 to vector<256x128xf32>
    %70 = arith.maximumf %68, %69 : vector<256x128xf32>
    %71 = vector.shape_cast %70 : vector<256x128xf32> to vector<1x256x128xf32>
    %cst_34 = arith.constant dense<0.000000e+00> : vector<1x128xf32>
    %72 = vector.multi_reduction <add>, %71, %cst_34 [1] : vector<1x256x128xf32> to vector<1x128xf32>
    %cst_35 = arith.constant 2.560000e+02 : f32
    %73 = vector.broadcast %cst_35 : f32 to vector<1x128xf32>
    %74 = arith.divf %72, %73 : vector<1x128xf32>
    %75 = arith.truncf %74 : vector<1x128xf32> to vector<1x128xbf16>
    %c0_36 = arith.constant 0 : index
    %c0_37 = arith.constant 0 : index
    %76 = vector.load %arg4[%c0_36, %c0_37] : memref<128x128xbf16, #tpu.memory_space<vmem>>, vector<128x128xbf16>
    %cst_38 = arith.constant dense<0.000000e+00> : vector<1x128xf32>
    %77 = tpu.matmul %75, %76, %cst_38 {dimension_numbers = #tpu.dot_dimension_numbers<[1], [0], [0], [1], [0, 0, 1, 1], [], []>} : vector<1x128xbf16>, vector<128x128xbf16>, vector<1x128xf32> -> vector<1x128xf32>
    %c1_39 = arith.constant 1 : index
    %c0_40 = arith.constant 0 : index
    %78 = vector.load %arg3[%c1_39, %c0_40] : memref<2x128xf32, #tpu.memory_space<vmem>>, vector<1x128xf32>
    %79 = arith.addf %77, %78 : vector<1x128xf32>
    %c0_41 = arith.constant 0 : index
    %c0_42 = arith.constant 0 : index
    %c0_43 = arith.constant 0 : index
    %80 = vector.load %arg5[%c0_41, %c0_42, %c0_43] : memref<1x1x128xf32, #tpu.memory_space<vmem>>, vector<1x1x128xf32>
    %81 = vector.shape_cast %80 : vector<1x1x128xf32> to vector<1x128xf32>
    %82 = vector.shape_cast %79 : vector<1x128xf32> to vector<1x1x128xf32>
    tpu.vector_store %arg5[%c0_41, %c0_42, %c0_43], %82 {strides = array<i32>} : memref<1x1x128xf32, #tpu.memory_space<vmem>>, vector<1x1x128xf32>,
    return
  }
  func.func @transform_0(%arg0: i32) -> (i32, i32, i32, i32) {
    %c0_i32 = arith.constant 0 : i32
    %c0_i32_0 = arith.constant 0 : i32
    %c0_i32_1 = arith.constant 0 : i32
    %c0_i32_2 = arith.constant 0 : i32
    return %arg0, %c0_i32, %c0_i32_0, %c0_i32_1 : i32, i32, i32, i32
  }
  func.func @transform_1(%arg0: i32) -> (i32, i32, i32) {
    %c0_i32 = arith.constant 0 : i32
    %c0_i32_0 = arith.constant 0 : i32
    %c0_i32_1 = arith.constant 0 : i32
    %c0_i32_2 = arith.constant 0 : i32
    return %c0_i32, %c0_i32_0, %c0_i32_1 : i32, i32, i32
  }
  func.func @transform_2(%arg0: i32) -> (i32, i32) {
    %c0_i32 = arith.constant 0 : i32
    %c0_i32_0 = arith.constant 0 : i32
    %c0_i32_1 = arith.constant 0 : i32
    return %c0_i32, %c0_i32_0 : i32, i32
  }
  func.func @transform_3(%arg0: i32) -> (i32, i32) {
    %c0_i32 = arith.constant 0 : i32
    %c0_i32_0 = arith.constant 0 : i32
    %c0_i32_1 = arith.constant 0 : i32
    return %c0_i32, %c0_i32_0 : i32, i32
  }
  func.func @transform_4(%arg0: i32) -> (i32, i32, i32) {
    %c0_i32 = arith.constant 0 : i32
    %c0_i32_0 = arith.constant 0 : i32
    %c0_i32_1 = arith.constant 0 : i32
    return %arg0, %c0_i32, %c0_i32_0 : i32, i32, i32
  }
}

</mosaic_0001>

<llo_original>
// kernel: tpu_custom_call.1
$region0: #{tpu_custom_call.1}
  #allocation0 [shape = 'u32[]', space=smem, size = 0x4, offset = 0x4, fixed_abs, tag = 'smem constant byte address 0x4 - core index']
  #allocation1 [shape = 'u32[144,128]{1,0:T(1,128)}', space=vmem, size = 0x12000, scoped, tag = 'internal scratch']
  %s0 = inlined_call_operand.vmem [shape: bf16[2,18,18,4], index: 0, kind: input, shape index: {}]
  %s1 = inlined_call_operand.vmem [shape: bf16[9,4,128], index: 1, kind: input, shape index: {}]
  %s2 = inlined_call_operand.vmem [shape: f32[2,128], index: 2, kind: input, shape index: {}]
  %s3 = inlined_call_operand.vmem [shape: bf16[128,128], index: 3, kind: input, shape index: {}]
  %s4 = inlined_call_operand.hbm [shape: f32[2,1,128], index: 4, kind: output, shape index: {}]
  %s5 = sld [smem:[#allocation0]]
  $region49: #{tpu_custom_call.1} parent=0
    _
  %s7 = ssub.s32 1, %s5
  %s8 = scalar_select 0, %s7, %s5
  $region1: #{tpu_custom_call.1} parent=0
    #allocation2 [shape = 'u8[1024]{0}', space=vmem, size = 0x400, scoped, tag = 'output window, operand 0']
    #allocation3 [shape = 's32[2]{0}', space=sflag, size = 0x8, scoped, tag = 'scoped memory for tpu_custom_call.1']
    %9 = vsyncpa [#allocation3], 0
    %s10 = scalar_lea.sflag [#allocation3], 1
    %11 = vsyncpa %s10, 0
    loop: start=0, step=1, limit=4
    $region2: #{tpu_custom_call.1} parent=1 // loop_pre_header
      _
    $region3: #{tpu_custom_call.1} parent=1 // loop_header
      %s13 = sphi 0, %s17
      %p14 = scmp.ge.s32.totalorder %s13, 4
      %s23 = sphi 0, %s25
      %s26 = sphi 0, %s23
      %s27 = sphi 0, %s26
      %s43 = sphi 0, %s27
      %s47 = sphi 0, %s47
      %s49 = sphi 0, %s47
      %s50 = sphi 0, %s49
      %s64 = sphi 0, %s50
      %s68 = sphi 0, %s68
      %s70 = sphi 0, %s68
      %s71 = sphi 0, %s70
      %s85 = sphi 0, %s71
      %s89 = sphi 0, %s89
      %s91 = sphi 0, %s89
      %s92 = sphi 0, %s91
      %s106 = sphi 0, %s92
      %s112 = sphi 0, %s114
      %s115 = sphi 0, %s112
      %s116 = sphi 0, %s115
      %s132 = sphi 0, %s116
    $region4: #{tpu_custom_call.1} parent=1 // loop_header_branch
      %16 = sbr.rel (%p14) target = $region8
    $region5: #{tpu_custom_call.1} parent=1 // loop_body
      %s18 = ssub.s32 %s13, 1
      %s19 = ssub.s32 %s13, 2
      %s20 = sadd.s32 %s13, 1
      %s21 = ssub.s32 %s13, %s20
      %p22 = scmp.eq.s32.totalorder %s21, 0
      %s24 = sadd.s32 %s23, 1
      %s25 = scalar_select %p22, %s23, %s24
      %p28 = pneg %p22
      %p29 = scmp.eq.s32.totalorder %s13, 1
      %p30 = por %p28, %p29
      %p31 = scmp.ne.s32.totalorder %s23, %s26
      %p32 = scmp.eq.s32.totalorder %s13, 0
      %p33 = por %p31, %p32
      %p34 = scmp.ne.s32.totalorder %s23, %s26
      %p35 = scmp.eq.s32.totalorder %s18, 1
      %p36 = por %p34, %p35
      %p37 = scmp.ne.s32.totalorder %s26, %s27
      %p38 = scmp.eq.s32.totalorder %s18, 0
      %p39 = por %p37, %p38
      %p40 = scmp.ne.s32.totalorder %s26, %s27
      %p41 = scmp.eq.s32.totalorder %s19, 1
      %p42 = por %p40, %p41
      %p44 = scmp.ne.s32.totalorder %s27, %s43
      %p45 = scmp.eq.s32.totalorder %s19, 0
      %p46 = por %p44, %p45
      %s48 = sadd.s32 %s47, 1
      %p51 = scmp.eq.s32.totalorder %s13, 1
      %p52 = scmp.ne.s32.totalorder %s47, %s49
      %p53 = scmp.eq.s32.totalorder %s13, 0
      %p54 = por %p52, %p53
      %p55 = scmp.ne.s32.totalorder %s47, %s49
      %p56 = scmp.eq.s32.totalorder %s18, 1
      %p57 = por %p55, %p56
      %p58 = scmp.ne.s32.totalorder %s49, %s50
      %p59 = scmp.eq.s32.totalorder %s18, 0
      %p60 = por %p58, %p59
      %p61 = scmp.ne.s32.totalorder %s49, %s50
      %p62 = scmp.eq.s32.totalorder %s19, 1
      %p63 = por %p61, %p62
      %p65 = scmp.ne.s32.totalorder %s50, %s64
      %p66 = scmp.eq.s32.totalorder %s19, 0
      %p67 = por %p65, %p66
      %s69 = sadd.s32 %s68, 1
      %p72 = scmp.eq.s32.totalorder %s13, 1
      %p73 = scmp.ne.s32.totalorder %s68, %s70
      %p74 = scmp.eq.s32.totalorder %s13, 0
      %p75 = por %p73, %p74
      %p76 = scmp.ne.s32.totalorder %s68, %s70
      %p77 = scmp.eq.s32.totalorder %s18, 1
      %p78 = por %p76, %p77
      %p79 = scmp.ne.s32.totalorder %s70, %s71
      %p80 = scmp.eq.s32.totalorder %s18, 0
      %p81 = por %p79, %p80
      %p82 = scmp.ne.s32.totalorder %s70, %s71
      %p83 = scmp.eq.s32.totalorder %s19, 1
      %p84 = por %p82, %p83
      %p86 = scmp.ne.s32.totalorder %s71, %s85
      %p87 = scmp.eq.s32.totalorder %s19, 0
      %p88 = por %p86, %p87
      %s90 = sadd.s32 %s89, 1
      %p93 = scmp.eq.s32.totalorder %s13, 1
      %p94 = scmp.ne.s32.totalorder %s89, %s91
      %p95 = scmp.eq.s32.totalorder %s13, 0
      %p96 = por %p94, %p95
      %p97 = scmp.ne.s32.totalorder %s89, %s91
      %p98 = scmp.eq.s32.totalorder %s18, 1
      %p99 = por %p97, %p98
      %p100 = scmp.ne.s32.totalorder %s91, %s92
      %p101 = scmp.eq.s32.totalorder %s18, 0
      %p102 = por %p100, %p101
      %p103 = scmp.ne.s32.totalorder %s91, %s92
      %p104 = scmp.eq.s32.totalorder %s19, 1
      %p105 = por %p103, %p104
      %p107 = scmp.ne.s32.totalorder %s92, %s106
      %p108 = scmp.eq.s32.totalorder %s19, 0
      %p109 = por %p107, %p108
      %s110 = ssub.s32 %s13, %s20
      %p111 = scmp.eq.s32.totalorder %s110, 0
      %s113 = sadd.s32 %s112, 1
      %s114 = scalar_select %p111, %s112, %s113
      %p117 = pneg %p111
      %p118 = scmp.eq.s32.totalorder %s13, 1
      %p119 = por %p117, %p118
      %p120 = scmp.ne.s32.totalorder %s112, %s115
      %p121 = scmp.eq.s32.totalorder %s13, 0
      %p122 = por %p120, %p121
      %p123 = scmp.ne.s32.totalorder %s112, %s115
      %p124 = scmp.eq.s32.totalorder %s18, 1
      %p125 = por %p123, %p124
      %p126 = scmp.ne.s32.totalorder %s115, %s116
      %p127 = scmp.eq.s32.totalorder %s18, 0
      %p128 = por %p126, %p127
      %p129 = scmp.ne.s32.totalorder %s115, %s116
      %p130 = scmp.eq.s32.totalorder %s19, 1
      %p131 = por %p129, %p130
      %p133 = scmp.ne.s32.totalorder %s116, %s132
      %p134 = scmp.eq.s32.totalorder %s19, 0
      %p135 = por %p133, %p134
      %p136 = scmp.le.s32.totalorder 1, %s13
      %p137 = scmp.lt.s32.totalorder %s13, 3
      %p138 = pnand %p136, %p137
      %p139 = pneg %p138
      // Predicated region
      $region9: #{tpu_custom_call.1} parent=5 // pred_check
        _
      $region10: #{tpu_custom_call.1} parent=5 // pred_check_branch
        %141 = sbr.rel (%p138) target = $region12
      $region11: #{tpu_custom_call.1} parent=5 // pred_region
        %s142 = ssub.s32 %s13, 1
        // Predicated region
        $region13: #{tpu_custom_call.1} parent=11 // pred_check
          %p143 = pneg %p60
        $region14: #{tpu_custom_call.1} parent=11 // pred_check_branch
          %145 = sbr.rel (%p143) target = $region16
        $region15: #{tpu_custom_call.1} parent=11 // pred_region
          _
        $region16: #{tpu_custom_call.1} parent=11 // pred_fallthru
          _
        // Predicated region
        $region17: #{tpu_custom_call.1} parent=11 // pred_check
          %p146 = pneg %p81
        $region18: #{tpu_custom_call.1} parent=11 // pred_check_branch
          %148 = sbr.rel (%p146) target = $region20
        $region19: #{tpu_custom_call.1} parent=11 // pred_region
          _
        $region20: #{tpu_custom_call.1} parent=11 // pred_fallthru
          _
        // Predicated region
        $region21: #{tpu_custom_call.1} parent=11 // pred_check
          %p149 = pneg %p102
        $region22: #{tpu_custom_call.1} parent=11 // pred_check_branch
          %151 = sbr.rel (%p149) target = $region24
        $region23: #{tpu_custom_call.1} parent=11 // pred_region
          _
        $region24: #{tpu_custom_call.1} parent=11 // pred_fallthru
          _
      $region12: #{tpu_custom_call.1} parent=5 // pred_fallthru
        _
      %p152 = scmp.lt.s32.totalorder %s13, 2
      // Predicated region
      $region25: #{tpu_custom_call.1} parent=5 // pred_check
        %p153 = pneg %p152
      $region26: #{tpu_custom_call.1} parent=5 // pred_check_branch
        %155 = sbr.rel (%p153) target = $region28
      $region27: #{tpu_custom_call.1} parent=5 // pred_region
        // Predicated region
        $region29: #{tpu_custom_call.1} parent=27 // pred_check
          %p156 = pneg %p33
        $region30: #{tpu_custom_call.1} parent=27 // pred_check_branch
          %158 = sbr.rel (%p156) target = $region32
        $region31: #{tpu_custom_call.1} parent=27 // pred_region
          %p159 = scmp.lt.s32.totalorder %s13, 1
          %s160 = scalar_select %p159, %s13, 1
          %s161 = smul.addr %s160, 54
          %s162 = smul.addr %s161, 4
          %s163 = scalar_lea.vmem %s0, %s162
        $region32: #{tpu_custom_call.1} parent=27 // pred_fallthru
          _
      $region28: #{tpu_custom_call.1} parent=5 // pred_fallthru
        _
      %p164 = scmp.le.s32.totalorder 1, %s13
      %p165 = scmp.lt.s32.totalorder %s13, 3
      %p166 = pnand %p164, %p165
      %p167 = pneg %p166
      // Predicated region
      $region33: #{tpu_custom_call.1} parent=5 // pred_check
        _
      $region34: #{tpu_custom_call.1} parent=5 // pred_check_branch
        %169 = sbr.rel (%p166) target = $region36
      $region35: #{tpu_custom_call.1} parent=5 // pred_region
        %s170 = ssub.s32 %s13, 1
        %p171 = scmp.lt.s32.totalorder %s18, 1
        %s172 = scalar_select %p171, %s18, 1
        %s173 = smul.addr %s172, 54
        %s174 = smul.addr %s173, 4
        %s175 = scalar_lea.vmem %s0, %s174
        %p176 = pneg %p39
        %p177 = pneg %p36
        %p178 = pneg %p60
        %p179 = pneg %p57
        %p180 = pneg %p81
        %p181 = pneg %p78
        %p182 = pneg %p102
        %p183 = pneg %p99
        %p184 = pneg %p128
        %p185 = pneg %p125
        %s186 = sand.u32 %s115, 1
        %s187 = scalar_lea.sflag [#allocation3], %s186
        %s188 = sand.u32 %s115, 1
        %s189 = scalar_lea.vmem [#allocation2], %s188
        %p190 = scmp.lt.s32.totalorder %s18, 1
        %s191 = scalar_select %p190, %s18, 1
        %s192 = smul.addr %s191, 54
        %s193 = smul.addr %s192, 4
        %s194 = scalar_lea.vmem %s0, %s193
        %v196 = vld [vmem:[%s194] sm:$0xf]
        %v197 = vld [vmem:[%s194 + $0x4] sm:$0xf]
        %v198 = vld [vmem:[%s194 + $0x8] sm:$0x1]
        %v199 = vld [vmem:[%s194 + $0xc] sm:$0xf]
        %v200 = vld [vmem:[%s194 + $0x10] sm:$0xf]
        %v201 = vld [vmem:[%s194 + $0x14] sm:$0x1]
        %v202 = vld [vmem:[%s194 + $0x18] sm:$0xf]
        %v203 = vld [vmem:[%s194 + $0x1c] sm:$0xf]
        %v204 = vld [vmem:[%s194 + $0x20] sm:$0x1]
        %v205 = vld [vmem:[%s194 + $0x24] sm:$0xf]
        %v206 = vld [vmem:[%s194 + $0x28] sm:$0xf]
        %v207 = vld [vmem:[%s194 + $0x2c] sm:$0x1]
        %v208 = vld [vmem:[%s194 + $0x30] sm:$0xf]
        %v209 = vld [vmem:[%s194 + $0x34] sm:$0xf]
        %v210 = vld [vmem:[%s194 + $0x38] sm:$0x1]
        %v211 = vld [vmem:[%s194 + $0x3c] sm:$0xf]
        %v212 = vld [vmem:[%s194 + $0x40] sm:$0xf]
        %v213 = vld [vmem:[%s194 + $0x44] sm:$0x1]
        %v214 = vld [vmem:[%s194 + $0x48] sm:$0xf]
        %v215 = vld [vmem:[%s194 + $0x4c] sm:$0xf]
        %v216 = vld [vmem:[%s194 + $0x50] sm:$0x1]
        %v217 = vld [vmem:[%s194 + $0x54] sm:$0xf]
        %v218 = vld [vmem:[%s194 + $0x58] sm:$0xf]
        %v219 = vld [vmem:[%s194 + $0x5c] sm:$0x1]
        %v220 = vld [vmem:[%s194 + $0x60] sm:$0xf]
        %v221 = vld [vmem:[%s194 + $0x64] sm:$0xf]
        %v222 = vld [vmem:[%s194 + $0x68] sm:$0x1]
        %v223 = vld [vmem:[%s194 + $0x6c] sm:$0xf]
        %v224 = vld [vmem:[%s194 + $0x70] sm:$0xf]
        %v225 = vld [vmem:[%s194 + $0x74] sm:$0x1]
        %v226 = vld [vmem:[%s194 + $0x78] sm:$0xf]
        %v227 = vld [vmem:[%s194 + $0x7c] sm:$0xf]
        %v228 = vld [vmem:[%s194 + $0x80] sm:$0x1]
        %v229 = vld [vmem:[%s194 + $0x84] sm:$0xf]
        %v230 = vld [vmem:[%s194 + $0x88] sm:$0xf]
        %v231 = vld [vmem:[%s194 + $0x8c] sm:$0x1]
        %v232 = vld [vmem:[%s194 + $0x90] sm:$0xf]
        %v233 = vld [vmem:[%s194 + $0x94] sm:$0xf]
        %v234 = vld [vmem:[%s194 + $0x98] sm:$0x1]
        %v235 = vld [vmem:[%s194 + $0x9c] sm:$0xf]
        %v236 = vld [vmem:[%s194 + $0xa0] sm:$0xf]
        %v237 = vld [vmem:[%s194 + $0xa4] sm:$0x1]
        %v238 = vld [vmem:[%s194 + $0xa8] sm:$0xf]
        %v239 = vld [vmem:[%s194 + $0xac] sm:$0xf]
        %v240 = vld [vmem:[%s194 + $0xb0] sm:$0x1]
        %v241 = vld [vmem:[%s194 + $0xb4] sm:$0xf]
        %v242 = vld [vmem:[%s194 + $0xb8] sm:$0xf]
        %v243 = vld [vmem:[%s194 + $0xbc] sm:$0x1]
        %v244 = vld [vmem:[%s194 + $0xc0] sm:$0xf]
        %v245 = vld [vmem:[%s194 + $0xc4] sm:$0xf]
        %v246 = vld [vmem:[%s194 + $0xc8] sm:$0x1]
        %v247 = vld [vmem:[%s194 + $0xcc] sm:$0xf]
        %v248 = vld [vmem:[%s194 + $0xd0] sm:$0xf]
        %v249 = vld [vmem:[%s194 + $0xd4] sm:$0x1]
        %v250 = vunpack.c.l.bf16 %v196
        %v251 = vunpack.c.l.bf16 %v197
        %v252 = vunpack.c.l.bf16 %v198
        %v253 = vunpack.c.l.bf16 %v199
        %v254 = vunpack.c.l.bf16 %v200
        %v255 = vunpack.c.l.bf16 %v201
        %v256 = vunpack.c.l.bf16 %v202
        %v257 = vunpack.c.l.bf16 %v203
        %v258 = vunpack.c.l.bf16 %v204
        %v259 = vunpack.c.l.bf16 %v205
        %v260 = vunpack.c.l.bf16 %v206
        %v261 = vunpack.c.l.bf16 %v207
        %v262 = vunpack.c.l.bf16 %v208
        %v263 = vunpack.c.l.bf16 %v209
        %v264 = vunpack.c.l.bf16 %v210
        %v265 = vunpack.c.l.bf16 %v211
        %v266 = vunpack.c.l.bf16 %v212
        %v267 = vunpack.c.l.bf16 %v213
        %v268 = vunpack.c.l.bf16 %v214
        %v269 = vunpack.c.l.bf16 %v215
        %v270 = vunpack.c.l.bf16 %v216
        %v271 = vunpack.c.l.bf16 %v217
        %v272 = vunpack.c.l.bf16 %v218
        %v273 = vunpack.c.l.bf16 %v219
        %v274 = vunpack.c.l.bf16 %v220
        %v275 = vunpack.c.l.bf16 %v221
        %v276 = vunpack.c.l.bf16 %v222
        %v277 = vunpack.c.l.bf16 %v223
        %v278 = vunpack.c.l.bf16 %v224
        %v279 = vunpack.c.l.bf16 %v225
        %v280 = vunpack.c.l.bf16 %v226
        %v281 = vunpack.c.l.bf16 %v227
        %v282 = vunpack.c.l.bf16 %v228
        %v283 = vunpack.c.l.bf16 %v229
        %v284 = vunpack.c.l.bf16 %v230
        %v285 = vunpack.c.l.bf16 %v231
        %v286 = vunpack.c.l.bf16 %v232
        %v287 = vunpack.c.l.bf16 %v233
        %v288 = vunpack.c.l.bf16 %v234
        %v289 = vunpack.c.l.bf16 %v235
        %v290 = vunpack.c.l.bf16 %v236
        %v291 = vunpack.c.l.bf16 %v237
        %v292 = vunpack.c.l.bf16 %v238
        %v293 = vunpack.c.l.bf16 %v239
        %v294 = vunpack.c.l.bf16 %v240
        %v295 = vunpack.c.l.bf16 %v241
        %v296 = vunpack.c.l.bf16 %v242
        %v297 = vunpack.c.l.bf16 %v243
        %v298 = vunpack.c.l.bf16 %v244
        %v299 = vunpack.c.l.bf16 %v245
        %v300 = vunpack.c.l.bf16 %v246
        %v301 = vunpack.c.l.bf16 %v247
        %v302 = vunpack.c.l.bf16 %v248
        %v303 = vunpack.c.l.bf16 %v249
        %v304 = vpack.c.bf16 %v251, %v250
        %v305 = vpack.c.bf16 %v254, %v253
        %v306 = vpack.c.bf16 %v257, %v256
        %v307 = vpack.c.bf16 %v260, %v259
        %v308 = vpack.c.bf16 %v263, %v262
        %v309 = vpack.c.bf16 %v266, %v265
        %v310 = vpack.c.bf16 %v269, %v268
        %v311 = vpack.c.bf16 %v272, %v271
        %v312 = vpack.c.bf16 %v275, %v274
        %v313 = vpack.c.bf16 %v278, %v277
        %v314 = vpack.c.bf16 %v281, %v280
        %v315 = vpack.c.bf16 %v284, %v283
        %v316 = vpack.c.bf16 %v287, %v286
        %v317 = vpack.c.bf16 %v290, %v289
        %v318 = vpack.c.bf16 %v293, %v292
        %v319 = vpack.c.bf16 %v296, %v295
        %v320 = vld [vmem:[%s1] sm:$0x3]
        %vm369 = vcmask 1046528
        %v370 = vrot.slane %v250, 1
        %v371 = vrot.slane %v251, 1
        %v372 = vsel %vm369, %v370, %v371
        %v373 = vrot.slane %v252, 1
        %v374 = vsel %vm369, %v371, %v373
        %v375 = vrot.slane %v253, 1
        %v376 = vrot.slane %v254, 1
        %v377 = vsel %vm369, %v375, %v376
        %v378 = vrot.slane %v255, 1
        %v379 = vsel %vm369, %v376, %v378
        %v380 = vrot.slane %v256, 1
        %v381 = vrot.slane %v257, 1
        %v382 = vsel %vm369, %v380, %v381
        %v383 = vrot.slane %v258, 1
        %v384 = vsel %vm369, %v381, %v383
        %v385 = vrot.slane %v259, 1
        %v386 = vrot.slane %v260, 1
        %v387 = vsel %vm369, %v385, %v386
        %v388 = vrot.slane %v261, 1
        %v389 = vsel %vm369, %v386, %v388
        %v390 = vrot.slane %v262, 1
        %v391 = vrot.slane %v263, 1
        %v392 = vsel %vm369, %v390, %v391
        %v393 = vrot.slane %v264, 1
        %v394 = vsel %vm369, %v391, %v393
        %v395 = vrot.slane %v265, 1
        %v396 = vrot.slane %v266, 1
        %v397 = vsel %vm369, %v395, %v396
        %v398 = vrot.slane %v267, 1
        %v399 = vsel %vm369, %v396, %v398
        %v400 = vrot.slane %v268, 1
        %v401 = vrot.slane %v269, 1
        %v402 = vsel %vm369, %v400, %v401
        %v403 = vrot.slane %v270, 1
        %v404 = vsel %vm369, %v401, %v403
        %v405 = vrot.slane %v271, 1
        %v406 = vrot.slane %v272, 1
        %v407 = vsel %vm369, %v405, %v406
        %v408 = vrot.slane %v273, 1
        %v409 = vsel %vm369, %v406, %v408
        %v410 = vrot.slane %v274, 1
        %v411 = vrot.slane %v275, 1
        %v412 = vsel %vm369, %v410, %v411
        %v413 = vrot.slane %v276, 1
        %v414 = vsel %vm369, %v411, %v413
        %v415 = vrot.slane %v277, 1
        %v416 = vrot.slane %v278, 1
        %v417 = vsel %vm369, %v415, %v416
        %v418 = vrot.slane %v279, 1
        %v419 = vsel %vm369, %v416, %v418
        %v420 = vrot.slane %v280, 1
        %v421 = vrot.slane %v281, 1
        %v422 = vsel %vm369, %v420, %v421
        %v423 = vrot.slane %v282, 1
        %v424 = vsel %vm369, %v421, %v423
        %v425 = vrot.slane %v283, 1
        %v426 = vrot.slane %v284, 1
        %v427 = vsel %vm369, %v425, %v426
        %v428 = vrot.slane %v285, 1
        %v429 = vsel %vm369, %v426, %v428
        %v430 = vrot.slane %v286, 1
        %v431 = vrot.slane %v287, 1
        %v432 = vsel %vm369, %v430, %v431
        %v433 = vrot.slane %v288, 1
        %v434 = vsel %vm369, %v431, %v433
        %v435 = vrot.slane %v289, 1
        %v436 = vrot.slane %v290, 1
        %v437 = vsel %vm369, %v435, %v436
        %v438 = vrot.slane %v291, 1
        %v439 = vsel %vm369, %v436, %v438
        %v440 = vrot.slane %v292, 1
        %v441 = vrot.slane %v293, 1
        %v442 = vsel %vm369, %v440, %v441
        %v443 = vrot.slane %v294, 1
        %v444 = vsel %vm369, %v441, %v443
        %v445 = vrot.slane %v295, 1
        %v446 = vrot.slane %v296, 1
        %v447 = vsel %vm369, %v445, %v446
        %v448 = vrot.slane %v297, 1
        %v449 = vsel %vm369, %v446, %v448
        %v482 = vpack.c.bf16 %v374, %v372
        %v483 = vpack.c.bf16 %v379, %v377
        %v484 = vpack.c.bf16 %v384, %v382
        %v485 = vpack.c.bf16 %v389, %v387
        %v486 = vpack.c.bf16 %v394, %v392
        %v487 = vpack.c.bf16 %v399, %v397
        %v488 = vpack.c.bf16 %v404, %v402
        %v489 = vpack.c.bf16 %v409, %v407
        %v490 = vpack.c.bf16 %v414, %v412
        %v491 = vpack.c.bf16 %v419, %v417
        %v492 = vpack.c.bf16 %v424, %v422
        %v493 = vpack.c.bf16 %v429, %v427
        %v494 = vpack.c.bf16 %v434, %v432
        %v495 = vpack.c.bf16 %v439, %v437
        %v496 = vpack.c.bf16 %v444, %v442
        %v497 = vpack.c.bf16 %v449, %v447
        %s498 = scalar_lea.vmem %s1, 2
        %v499 = vld [vmem:[%s498] sm:$0x3]
        %vm500 = vcmask 31744
        %v502 = vsel %vm500, %v482, 0
        %v505 = vsel %vm500, %v483, 0
        %v508 = vsel %vm500, %v484, 0
        %v511 = vsel %vm500, %v485, 0
        %v514 = vsel %vm500, %v486, 0
        %v517 = vsel %vm500, %v487, 0
        %v520 = vsel %vm500, %v488, 0
        %v523 = vsel %vm500, %v489, 0
        %v526 = vsel %vm500, %v490, 0
        %v529 = vsel %vm500, %v491, 0
        %v532 = vsel %vm500, %v492, 0
        %v535 = vsel %vm500, %v493, 0
        %v538 = vsel %vm500, %v494, 0
        %v541 = vsel %vm500, %v495, 0
        %v544 = vsel %vm500, %v496, 0
        %v547 = vsel %vm500, %v497, 0
        %vm549 = vcmask 1041408
        %v551 = vsel %vm549, %v499, 0
        %553 = vmatprep.subr.bf16.mxu0 0
        %554 = vmatpush1.bf16.msra.mxu0 0
        %555 = vmatprep.subr.bf16.mxu0 0
        %556 = vmatpush1.bf16.msra.mxu0 0
        %557 = vmatprep.subr.bf16.mxu0 0
        %558 = vmatpush1.bf16.msra.mxu0 0
        %559 = vmatprep.subr.bf16.mxu0 0
        %560 = vmatpush1.bf16.msra.mxu0 0
        %561 = vmatprep.subr.bf16.mxu0 0
        %562 = vmatpush1.bf16.msra.mxu0 0
        %563 = vmatprep.subr.bf16.mxu0 0
        %564 = vmatpush1.bf16.msra.mxu0 0
        %565 = vmatprep.subr.bf16.mxu0 0
        %566 = vmatpush1.bf16.msra.mxu0 0
        %567 = vmatprep.subr.bf16.mxu0 0
        %568 = vmatpush1.bf16.msra.mxu0 %v551
        %569 = vmatprep.subr.bf16.mxu0 0
        %570 = vmatpush2.bf16.msra.mxu0 0
        %571 = vmatprep.subr.bf16.mxu0 0
        %572 = vmatpush2.bf16.msra.mxu0 0
        %573 = vmatprep.subr.bf16.mxu0 0
        %574 = vmatpush2.bf16.msra.mxu0 0
        %575 = vmatprep.subr.bf16.mxu0 0
        %576 = vmatpush2.bf16.msra.mxu0 0
        %577 = vmatprep.subr.bf16.mxu0 0
        %578 = vmatpush2.bf16.msra.mxu0 0
        %579 = vmatprep.subr.bf16.mxu0 0
        %580 = vmatpush2.bf16.msra.mxu0 0
        %581 = vmatprep.subr.bf16.mxu0 0
        %582 = vmatpush2.bf16.msra.mxu0 0
        %583 = vmatprep.subr.bf16.mxu0 0
        %584 = vmatpush2.bf16.msra.mxu0 0
        %585 = vmatprep.mubr.bf16.mxu0 0
        %586 = vmatmul.mubr.bf16.gmra.mxu0 %v502
        %v587 = vpop.f32.mrf.mxu0
        %v588 = vadd.f32 0.0, %v587
        %v589 = vpop.f32.mrf.mxu0
        %v590 = vpop.f32.mrf.mxu0
        %v591 = vadd.f32 0.0, %v590
        %v592 = vpop.f32.mrf.mxu0
        %593 = vmatprep.mubr.bf16.mxu0 0
        %594 = vmatmul.mubr.bf16.gmra.mxu0 %v505
        %v595 = vpop.f32.mrf.mxu0
        %v596 = vadd.f32 0.0, %v595
        %v597 = vpop.f32.mrf.mxu0
        %v598 = vpop.f32.mrf.mxu0
        %v599 = vadd.f32 0.0, %v598
        %v600 = vpop.f32.mrf.mxu0
        %601 = vmatprep.mubr.bf16.mxu0 0
        %602 = vmatmul.mubr.bf16.gmra.mxu0 %v508
        %v603 = vpop.f32.mrf.mxu0
        %v604 = vadd.f32 0.0, %v603
        %v605 = vpop.f32.mrf.mxu0
        %v606 = vpop.f32.mrf.mxu0
        %v607 = vadd.f32 0.0, %v606
        %v608 = vpop.f32.mrf.mxu0
        %609 = vmatprep.mubr.bf16.mxu0 0
        %610 = vmatmul.mubr.bf16.gmra.mxu0 %v511
        %v611 = vpop.f32.mrf.mxu0
        %v612 = vadd.f32 0.0, %v611
        %v613 = vpop.f32.mrf.mxu0
        %v614 = vpop.f32.mrf.mxu0
        %v615 = vadd.f32 0.0, %v614
        %v616 = vpop.f32.mrf.mxu0
        %617 = vmatprep.mubr.bf16.mxu0 0
        %618 = vmatmul.mubr.bf16.gmra.mxu0 %v514
        %v619 = vpop.f32.mrf.mxu0
        %v620 = vadd.f32 0.0, %v619
        %v621 = vpop.f32.mrf.mxu0
        %v622 = vpop.f32.mrf.mxu0
        %v623 = vadd.f32 0.0, %v622
        %v624 = vpop.f32.mrf.mxu0
        %625 = vmatprep.mubr.bf16.mxu0 0
        %626 = vmatmul.mubr.bf16.gmra.mxu0 %v517
        %v627 = vpop.f32.mrf.mxu0
        %v628 = vadd.f32 0.0, %v627
        %v629 = vpop.f32.mrf.mxu0
        %v630 = vpop.f32.mrf.mxu0
        %v631 = vadd.f32 0.0, %v630
        %v632 = vpop.f32.mrf.mxu0
        %633 = vmatprep.mubr.bf16.mxu0 0
        %634 = vmatmul.mubr.bf16.gmra.mxu0 %v520
        %v635 = vpop.f32.mrf.mxu0
        %v636 = vadd.f32 0.0, %v635
        %v637 = vpop.f32.mrf.mxu0
        %v638 = vpop.f32.mrf.mxu0
        %v639 = vadd.f32 0.0, %v638
        %v640 = vpop.f32.mrf.mxu0
        %641 = vmatprep.mubr.bf16.mxu0 0
        %642 = vmatmul.mubr.bf16.gmra.mxu0 %v523
        %v643 = vpop.f32.mrf.mxu0
        %v644 = vadd.f32 0.0, %v643
        %v645 = vpop.f32.mrf.mxu0
        %v646 = vpop.f32.mrf.mxu0
        %v647 = vadd.f32 0.0, %v646
        %v648 = vpop.f32.mrf.mxu0
        %649 = vmatprep.mubr.bf16.mxu0 0
        %650 = vmatmul.mubr.bf16.gmra.mxu0 %v526
        %v651 = vpop.f32.mrf.mxu0
        %v652 = vadd.f32 0.0, %v651
        %v653 = vpop.f32.mrf.mxu0
        %v654 = vpop.f32.mrf.mxu0
        %v655 = vadd.f32 0.0, %v654
        %v656 = vpop.f32.mrf.mxu0
        %657 = vmatprep.mubr.bf16.mxu0 0
        %658 = vmatmul.mubr.bf16.gmra.mxu0 %v529
        %v659 = vpop.f32.mrf.mxu0
        %v660 = vadd.f32 0.0, %v659
        %v661 = vpop.f32.mrf.mxu0
        %v662 = vpop.f32.mrf.mxu0
        %v663 = vadd.f32 0.0, %v662
        %v664 = vpop.f32.mrf.mxu0
        %665 = vmatprep.mubr.bf16.mxu0 0
        %666 = vmatmul.mubr.bf16.gmra.mxu0 %v532
        %v667 = vpop.f32.mrf.mxu0
        %v668 = vadd.f32 0.0, %v667
        %v669 = vpop.f32.mrf.mxu0
        %v670 = vpop.f32.mrf.mxu0
        %v671 = vadd.f32 0.0, %v670
        %v672 = vpop.f32.mrf.mxu0
        %673 = vmatprep.mubr.bf16.mxu0 0
        %674 = vmatmul.mubr.bf16.gmra.mxu0 %v535
        %v675 = vpop.f32.mrf.mxu0
        %v676 = vadd.f32 0.0, %v675
        %v677 = vpop.f32.mrf.mxu0
        %v678 = vpop.f32.mrf.mxu0
        %v679 = vadd.f32 0.0, %v678
        %v680 = vpop.f32.mrf.mxu0
        %681 = vmatprep.mubr.bf16.mxu0 0
        %682 = vmatmul.mubr.bf16.gmra.mxu0 %v538
        %v683 = vpop.f32.mrf.mxu0
        %v684 = vadd.f32 0.0, %v683
        %v685 = vpop.f32.mrf.mxu0
        %v686 = vpop.f32.mrf.mxu0
        %v687 = vadd.f32 0.0, %v686
        %v688 = vpop.f32.mrf.mxu0
        %689 = vmatprep.mubr.bf16.mxu0 0
        %690 = vmatmul.mubr.bf16.gmra.mxu0 %v541
        %v691 = vpop.f32.mrf.mxu0
        %v692 = vadd.f32 0.0, %v691
        %v693 = vpop.f32.mrf.mxu0
        %v694 = vpop.f32.mrf.mxu0
        %v695 = vadd.f32 0.0, %v694
        %v696 = vpop.f32.mrf.mxu0
        %697 = vmatprep.mubr.bf16.mxu0 0
        %698 = vmatmul.mubr.bf16.gmra.mxu0 %v544
        %v699 = vpop.f32.mrf.mxu0
        %v700 = vadd.f32 0.0, %v699
        %v701 = vpop.f32.mrf.mxu0
        %v702 = vpop.f32.mrf.mxu0
        %v703 = vadd.f32 0.0, %v702
        %v704 = vpop.f32.mrf.mxu0
        %705 = vmatprep.mubr.bf16.mxu0 0
        %706 = vmatmul.mubr.bf16.gmra.mxu0 %v547
        %v707 = vpop.f32.mrf.mxu0
        %v708 = vadd.f32 0.0, %v707
        %v709 = vpop.f32.mrf.mxu0
        %v710 = vpop.f32.mrf.mxu0
        %v711 = vadd.f32 0.0, %v710
        %v712 = vpop.f32.mrf.mxu0
        %713 = vdwg.mxu0
        %v715 = vsel %vm500, %v304, 0
        %v718 = vsel %vm500, %v305, 0
        %v721 = vsel %vm500, %v306, 0
        %v724 = vsel %vm500, %v307, 0
        %v727 = vsel %vm500, %v308, 0
        %v730 = vsel %vm500, %v309, 0
        %v733 = vsel %vm500, %v310, 0
        %v736 = vsel %vm500, %v311, 0
        %v739 = vsel %vm500, %v312, 0
        %v742 = vsel %vm500, %v313, 0
        %v745 = vsel %vm500, %v314, 0
        %v748 = vsel %vm500, %v315, 0
        %v751 = vsel %vm500, %v316, 0
        %v754 = vsel %vm500, %v317, 0
        %v757 = vsel %vm500, %v318, 0
        %v760 = vsel %vm500, %v319, 0
        %v763 = vsel %vm549, %v320, 0
        %765 = vmatprep.subr.bf16.mxu0 0
        %766 = vmatpush1.bf16.msra.mxu0 0
        %767 = vmatprep.subr.bf16.mxu0 0
        %768 = vmatpush1.bf16.msra.mxu0 0
        %769 = vmatprep.subr.bf16.mxu0 0
        %770 = vmatpush1.bf16.msra.mxu0 0
        %771 = vmatprep.subr.bf16.mxu0 0
        %772 = vmatpush1.bf16.msra.mxu0 0
        %773 = vmatprep.subr.bf16.mxu0 0
        %774 = vmatpush1.bf16.msra.mxu0 0
        %775 = vmatprep.subr.bf16.mxu0 0
        %776 = vmatpush1.bf16.msra.mxu0 0
        %777 = vmatprep.subr.bf16.mxu0 0
        %778 = vmatpush1.bf16.msra.mxu0 0
        %779 = vmatprep.subr.bf16.mxu0 0
        %780 = vmatpush1.bf16.msra.mxu0 %v763
        %781 = vmatprep.subr.bf16.mxu0 0
        %782 = vmatpush2.bf16.msra.mxu0 0
        %783 = vmatprep.subr.bf16.mxu0 0
        %784 = vmatpush2.bf16.msra.mxu0 0
        %785 = vmatprep.subr.bf16.mxu0 0
        %786 = vmatpush2.bf16.msra.mxu0 0
        %787 = vmatprep.subr.bf16.mxu0 0
        %788 = vmatpush2.bf16.msra.mxu0 0
        %789 = vmatprep.subr.bf16.mxu0 0
        %790 = vmatpush2.bf16.msra.mxu0 0
        %791 = vmatprep.subr.bf16.mxu0 0
        %792 = vmatpush2.bf16.msra.mxu0 0
        %793 = vmatprep.subr.bf16.mxu0 0
        %794 = vmatpush2.bf16.msra.mxu0 0
        %795 = vmatprep.subr.bf16.mxu0 0
        %796 = vmatpush2.bf16.msra.mxu0 0
        %797 = vmatprep.mubr.bf16.mxu0 0
        %798 = vmatmul.mubr.bf16.gmra.mxu0 %v715
        %v799 = vpop.f32.mrf.mxu0
        %v800 = vadd.f32 %v588, %v799
        %v801 = vpop.f32.mrf.mxu0
        %v802 = vpop.f32.mrf.mxu0
        %v803 = vadd.f32 %v591, %v802
        %v804 = vpop.f32.mrf.mxu0
        %805 = vmatprep.mubr.bf16.mxu0 0
        %806 = vmatmul.mubr.bf16.gmra.mxu0 %v718
        %v807 = vpop.f32.mrf.mxu0
        %v808 = vadd.f32 %v596, %v807
        %v809 = vpop.f32.mrf.mxu0
        %v810 = vpop.f32.mrf.mxu0
        %v811 = vadd.f32 %v599, %v810
        %v812 = vpop.f32.mrf.mxu0
        %813 = vmatprep.mubr.bf16.mxu0 0
        %814 = vmatmul.mubr.bf16.gmra.mxu0 %v721
        %v815 = vpop.f32.mrf.mxu0
        %v816 = vadd.f32 %v604, %v815
        %v817 = vpop.f32.mrf.mxu0
        %v818 = vpop.f32.mrf.mxu0
        %v819 = vadd.f32 %v607, %v818
        %v820 = vpop.f32.mrf.mxu0
        %821 = vmatprep.mubr.bf16.mxu0 0
        %822 = vmatmul.mubr.bf16.gmra.mxu0 %v724
        %v823 = vpop.f32.mrf.mxu0
        %v824 = vadd.f32 %v612, %v823
        %v825 = vpop.f32.mrf.mxu0
        %v826 = vpop.f32.mrf.mxu0
        %v827 = vadd.f32 %v615, %v826
        %v828 = vpop.f32.mrf.mxu0
        %829 = vmatprep.mubr.bf16.mxu0 0
        %830 = vmatmul.mubr.bf16.gmra.mxu0 %v727
        %v831 = vpop.f32.mrf.mxu0
        %v832 = vadd.f32 %v620, %v831
        %v833 = vpop.f32.mrf.mxu0
        %v834 = vpop.f32.mrf.mxu0
        %v835 = vadd.f32 %v623, %v834
        %v836 = vpop.f32.mrf.mxu0
        %837 = vmatprep.mubr.bf16.mxu0 0
        %838 = vmatmul.mubr.bf16.gmra.mxu0 %v730
        %v839 = vpop.f32.mrf.mxu0
        %v840 = vadd.f32 %v628, %v839
        %v841 = vpop.f32.mrf.mxu0
        %v842 = vpop.f32.mrf.mxu0
        %v843 = vadd.f32 %v631, %v842
        %v844 = vpop.f32.mrf.mxu0
        %845 = vmatprep.mubr.bf16.mxu0 0
        %846 = vmatmul.mubr.bf16.gmra.mxu0 %v733
        %v847 = vpop.f32.mrf.mxu0
        %v848 = vadd.f32 %v636, %v847
        %v849 = vpop.f32.mrf.mxu0
        %v850 = vpop.f32.mrf.mxu0
        %v851 = vadd.f32 %v639, %v850
        %v852 = vpop.f32.mrf.mxu0
        %853 = vmatprep.mubr.bf16.mxu0 0
        %854 = vmatmul.mubr.bf16.gmra.mxu0 %v736
        %v855 = vpop.f32.mrf.mxu0
        %v856 = vadd.f32 %v644, %v855
        %v857 = vpop.f32.mrf.mxu0
        %v858 = vpop.f32.mrf.mxu0
        %v859 = vadd.f32 %v647, %v858
        %v860 = vpop.f32.mrf.mxu0
        %861 = vmatprep.mubr.bf16.mxu0 0
        %862 = vmatmul.mubr.bf16.gmra.mxu0 %v739
        %v863 = vpop.f32.mrf.mxu0
        %v864 = vadd.f32 %v652, %v863
        %v865 = vpop.f32.mrf.mxu0
        %v866 = vpop.f32.mrf.mxu0
        %v867 = vadd.f32 %v655, %v866
        %v868 = vpop.f32.mrf.mxu0
        %869 = vmatprep.mubr.bf16.mxu0 0
        %870 = vmatmul.mubr.bf16.gmra.mxu0 %v742
        %v871 = vpop.f32.mrf.mxu0
        %v872 = vadd.f32 %v660, %v871
        %v873 = vpop.f32.mrf.mxu0
        %v874 = vpop.f32.mrf.mxu0
        %v875 = vadd.f32 %v663, %v874
        %v876 = vpop.f32.mrf.mxu0
        %877 = vmatprep.mubr.bf16.mxu0 0
        %878 = vmatmul.mubr.bf16.gmra.mxu0 %v745
        %v879 = vpop.f32.mrf.mxu0
        %v880 = vadd.f32 %v668, %v879
        %v881 = vpop.f32.mrf.mxu0
        %v882 = vpop.f32.mrf.mxu0
        %v883 = vadd.f32 %v671, %v882
        %v884 = vpop.f32.mrf.mxu0
        %885 = vmatprep.mubr.bf16.mxu0 0
        %886 = vmatmul.mubr.bf16.gmra.mxu0 %v748
        %v887 = vpop.f32.mrf.mxu0
        %v888 = vadd.f32 %v676, %v887
        %v889 = vpop.f32.mrf.mxu0
        %v890 = vpop.f32.mrf.mxu0
        %v891 = vadd.f32 %v679, %v890
        %v892 = vpop.f32.mrf.mxu0
        %893 = vmatprep.mubr.bf16.mxu0 0
        %894 = vmatmul.mubr.bf16.gmra.mxu0 %v751
        %v895 = vpop.f32.mrf.mxu0
        %v896 = vadd.f32 %v684, %v895
        %v897 = vpop.f32.mrf.mxu0
        %v898 = vpop.f32.mrf.mxu0
        %v899 = vadd.f32 %v687, %v898
        %v900 = vpop.f32.mrf.mxu0
        %901 = vmatprep.mubr.bf16.mxu0 0
        %902 = vmatmul.mubr.bf16.gmra.mxu0 %v754
        %v903 = vpop.f32.mrf.mxu0
        %v904 = vadd.f32 %v692, %v903
        %v905 = vpop.f32.mrf.mxu0
        %v906 = vpop.f32.mrf.mxu0
        %v907 = vadd.f32 %v695, %v906
        %v908 = vpop.f32.mrf.mxu0
        %909 = vmatprep.mubr.bf16.mxu0 0
        %910 = vmatmul.mubr.bf16.gmra.mxu0 %v757
        %v911 = vpop.f32.mrf.mxu0
        %v912 = vadd.f32 %v700, %v911
        %v913 = vpop.f32.mrf.mxu0
        %v914 = vpop.f32.mrf.mxu0
        %v915 = vadd.f32 %v703, %v914
        %v916 = vpop.f32.mrf.mxu0
        %917 = vmatprep.mubr.bf16.mxu0 0
        %918 = vmatmul.mubr.bf16.gmra.mxu0 %v760
        %v919 = vpop.f32.mrf.mxu0
        %v920 = vadd.f32 %v708, %v919
        %v921 = vpop.f32.mrf.mxu0
        %v922 = vpop.f32.mrf.mxu0
        %v923 = vadd.f32 %v711, %v922
        %v924 = vpop.f32.mrf.mxu0
        %925 = vdwg.mxu0
        %vm926 = vcmask 1045504
        %v927 = vrot.slane %v250, 2
        %v928 = vrot.slane %v251, 2
        %v929 = vsel %vm926, %v927, %v928
        %v930 = vrot.slane %v252, 2
        %v931 = vsel %vm926, %v928, %v930
        %v932 = vrot.slane %v253, 2
        %v933 = vrot.slane %v254, 2
        %v934 = vsel %vm926, %v932, %v933
        %v935 = vrot.slane %v255, 2
        %v936 = vsel %vm926, %v933, %v935
        %v937 = vrot.slane %v256, 2
        %v938 = vrot.slane %v257, 2
        %v939 = vsel %vm926, %v937, %v938
        %v940 = vrot.slane %v258, 2
        %v941 = vsel %vm926, %v938, %v940
        %v942 = vrot.slane %v259, 2
        %v943 = vrot.slane %v260, 2
        %v944 = vsel %vm926, %v942, %v943
        %v945 = vrot.slane %v261, 2
        %v946 = vsel %vm926, %v943, %v945
        %v947 = vrot.slane %v262, 2
        %v948 = vrot.slane %v263, 2
        %v949 = vsel %vm926, %v947, %v948
        %v950 = vrot.slane %v264, 2
        %v951 = vsel %vm926, %v948, %v950
        %v952 = vrot.slane %v265, 2
        %v953 = vrot.slane %v266, 2
        %v954 = vsel %vm926, %v952, %v953
        %v955 = vrot.slane %v267, 2
        %v956 = vsel %vm926, %v953, %v955
        %v957 = vrot.slane %v268, 2
        %v958 = vrot.slane %v269, 2
        %v959 = vsel %vm926, %v957, %v958
        %v960 = vrot.slane %v270, 2
        %v961 = vsel %vm926, %v958, %v960
        %v962 = vrot.slane %v271, 2
        %v963 = vrot.slane %v272, 2
        %v964 = vsel %vm926, %v962, %v963
        %v965 = vrot.slane %v273, 2
        %v966 = vsel %vm926, %v963, %v965
        %v967 = vrot.slane %v274, 2
        %v968 = vrot.slane %v275, 2
        %v969 = vsel %vm926, %v967, %v968
        %v970 = vrot.slane %v276, 2
        %v971 = vsel %vm926, %v968, %v970
        %v972 = vrot.slane %v277, 2
        %v973 = vrot.slane %v278, 2
        %v974 = vsel %vm926, %v972, %v973
        %v975 = vrot.slane %v279, 2
        %v976 = vsel %vm926, %v973, %v975
        %v977 = vrot.slane %v280, 2
        %v978 = vrot.slane %v281, 2
        %v979 = vsel %vm926, %v977, %v978
        %v980 = vrot.slane %v282, 2
        %v981 = vsel %vm926, %v978, %v980
        %v982 = vrot.slane %v283, 2
        %v983 = vrot.slane %v284, 2
        %v984 = vsel %vm926, %v982, %v983
        %v985 = vrot.slane %v285, 2
        %v986 = vsel %vm926, %v983, %v985
        %v987 = vrot.slane %v286, 2
        %v988 = vrot.slane %v287, 2
        %v989 = vsel %vm926, %v987, %v988
        %v990 = vrot.slane %v288, 2
        %v991 = vsel %vm926, %v988, %v990
        %v992 = vrot.slane %v289, 2
        %v993 = vrot.slane %v290, 2
        %v994 = vsel %vm926, %v992, %v993
        %v995 = vrot.slane %v291, 2
        %v996 = vsel %vm926, %v993, %v995
        %v997 = vrot.slane %v292, 2
        %v998 = vrot.slane %v293, 2
        %v999 = vsel %vm926, %v997, %v998
        %v1000 = vrot.slane %v294, 2
        %v1001 = vsel %vm926, %v998, %v1000
        %v1002 = vrot.slane %v295, 2
        %v1003 = vrot.slane %v296, 2
        %v1004 = vsel %vm926, %v1002, %v1003
        %v1005 = vrot.slane %v297, 2
        %v1006 = vsel %vm926, %v1003, %v1005
        %v1039 = vpack.c.bf16 %v931, %v929
        %v1040 = vpack.c.bf16 %v936, %v934
        %v1041 = vpack.c.bf16 %v941, %v939
        %v1042 = vpack.c.bf16 %v946, %v944
        %v1043 = vpack.c.bf16 %v951, %v949
        %v1044 = vpack.c.bf16 %v956, %v954
        %v1045 = vpack.c.bf16 %v961, %v959
        %v1046 = vpack.c.bf16 %v966, %v964
        %v1047 = vpack.c.bf16 %v971, %v969
        %v1048 = vpack.c.bf16 %v976, %v974
        %v1049 = vpack.c.bf16 %v981, %v979
        %v1050 = vpack.c.bf16 %v986, %v984
        %v1051 = vpack.c.bf16 %v991, %v989
        %v1052 = vpack.c.bf16 %v996, %v994
        %v1053 = vpack.c.bf16 %v1001, %v999
        %v1054 = vpack.c.bf16 %v1006, %v1004
        %s1055 = scalar_lea.vmem %s1, 4
        %v1056 = vld [vmem:[%s1055] sm:$0x3]
        %v1058 = vsel %vm500, %v1039, 0
        %v1061 = vsel %vm500, %v1040, 0
        %v1064 = vsel %vm500, %v1041, 0
        %v1067 = vsel %vm500, %v1042, 0
        %v1070 = vsel %vm500, %v1043, 0
        %v1073 = vsel %vm500, %v1044, 0
        %v1076 = vsel %vm500, %v1045, 0
        %v1079 = vsel %vm500, %v1046, 0
        %v1082 = vsel %vm500, %v1047, 0
        %v1085 = vsel %vm500, %v1048, 0
        %v1088 = vsel %vm500, %v1049, 0
        %v1091 = vsel %vm500, %v1050, 0
        %v1094 = vsel %vm500, %v1051, 0
        %v1097 = vsel %vm500, %v1052, 0
        %v1100 = vsel %vm500, %v1053, 0
        %v1103 = vsel %vm500, %v1054, 0
        %v1106 = vsel %vm549, %v1056, 0
        %1108 = vmatprep.subr.bf16.mxu0 0
        %1109 = vmatpush1.bf16.msra.mxu0 0
        %1110 = vmatprep.subr.bf16.mxu0 0
        %1111 = vmatpush1.bf16.msra.mxu0 0
        %1112 = vmatprep.subr.bf16.mxu0 0
        %1113 = vmatpush1.bf16.msra.mxu0 0
        %1114 = vmatprep.subr.bf16.mxu0 0
        %1115 = vmatpush1.bf16.msra.mxu0 0
        %1116 = vmatprep.subr.bf16.mxu0 0
        %1117 = vmatpush1.bf16.msra.mxu0 0
        %1118 = vmatprep.subr.bf16.mxu0 0
        %1119 = vmatpush1.bf16.msra.mxu0 0
        %1120 = vmatprep.subr.bf16.mxu0 0
        %1121 = vmatpush1.bf16.msra.mxu0 0
        %1122 = vmatprep.subr.bf16.mxu0 0
        %1123 = vmatpush1.bf16.msra.mxu0 %v1106
        %1124 = vmatprep.subr.bf16.mxu0 0
        %1125 = vmatpush2.bf16.msra.mxu0 0
        %1126 = vmatprep.subr.bf16.mxu0 0
        %1127 = vmatpush2.bf16.msra.mxu0 0
        %1128 = vmatprep.subr.bf16.mxu0 0
        %1129 = vmatpush2.bf16.msra.mxu0 0
        %1130 = vmatprep.subr.bf16.mxu0 0
        %1131 = vmatpush2.bf16.msra.mxu0 0
        %1132 = vmatprep.subr.bf16.mxu0 0
        %1133 = vmatpush2.bf16.msra.mxu0 0
        %1134 = vmatprep.subr.bf16.mxu0 0
        %1135 = vmatpush2.bf16.msra.mxu0 0
        %1136 = vmatprep.subr.bf16.mxu0 0
        %1137 = vmatpush2.bf16.msra.mxu0 0
        %1138 = vmatprep.subr.bf16.mxu0 0
        %1139 = vmatpush2.bf16.msra.mxu0 0
        %1140 = vmatprep.mubr.bf16.mxu0 0
        %1141 = vmatmul.mubr.bf16.gmra.mxu0 %v1058
        %v1142 = vpop.f32.mrf.mxu0
        %v1143 = vadd.f32 0.0, %v1142
        %v1144 = vpop.f32.mrf.mxu0
        %v1145 = vpop.f32.mrf.mxu0
        %v1146 = vadd.f32 0.0, %v1145
        %v1147 = vpop.f32.mrf.mxu0
        %1148 = vmatprep.mubr.bf16.mxu0 0
        %1149 = vmatmul.mubr.bf16.gmra.mxu0 %v1061
        %v1150 = vpop.f32.mrf.mxu0
        %v1151 = vadd.f32 0.0, %v1150
        %v1152 = vpop.f32.mrf.mxu0
        %v1153 = vpop.f32.mrf.mxu0
        %v1154 = vadd.f32 0.0, %v1153
        %v1155 = vpop.f32.mrf.mxu0
        %1156 = vmatprep.mubr.bf16.mxu0 0
        %1157 = vmatmul.mubr.bf16.gmra.mxu0 %v1064
        %v1158 = vpop.f32.mrf.mxu0
        %v1159 = vadd.f32 0.0, %v1158
        %v1160 = vpop.f32.mrf.mxu0
        %v1161 = vpop.f32.mrf.mxu0
        %v1162 = vadd.f32 0.0, %v1161
        %v1163 = vpop.f32.mrf.mxu0
        %1164 = vmatprep.mubr.bf16.mxu0 0
        %1165 = vmatmul.mubr.bf16.gmra.mxu0 %v1067
        %v1166 = vpop.f32.mrf.mxu0
        %v1167 = vadd.f32 0.0, %v1166
        %v1168 = vpop.f32.mrf.mxu0
        %v1169 = vpop.f32.mrf.mxu0
        %v1170 = vadd.f32 0.0, %v1169
        %v1171 = vpop.f32.mrf.mxu0
        %1172 = vmatprep.mubr.bf16.mxu0 0
        %1173 = vmatmul.mubr.bf16.gmra.mxu0 %v1070
        %v1174 = vpop.f32.mrf.mxu0
        %v1175 = vadd.f32 0.0, %v1174
        %v1176 = vpop.f32.mrf.mxu0
        %v1177 = vpop.f32.mrf.mxu0
        %v1178 = vadd.f32 0.0, %v1177
        %v1179 = vpop.f32.mrf.mxu0
        %1180 = vmatprep.mubr.bf16.mxu0 0
        %1181 = vmatmul.mubr.bf16.gmra.mxu0 %v1073
        %v1182 = vpop.f32.mrf.mxu0
        %v1183 = vadd.f32 0.0, %v1182
        %v1184 = vpop.f32.mrf.mxu0
        %v1185 = vpop.f32.mrf.mxu0
        %v1186 = vadd.f32 0.0, %v1185
        %v1187 = vpop.f32.mrf.mxu0
        %1188 = vmatprep.mubr.bf16.mxu0 0
        %1189 = vmatmul.mubr.bf16.gmra.mxu0 %v1076
        %v1190 = vpop.f32.mrf.mxu0
        %v1191 = vadd.f32 0.0, %v1190
        %v1192 = vpop.f32.mrf.mxu0
        %v1193 = vpop.f32.mrf.mxu0
        %v1194 = vadd.f32 0.0, %v1193
        %v1195 = vpop.f32.mrf.mxu0
        %1196 = vmatprep.mubr.bf16.mxu0 0
        %1197 = vmatmul.mubr.bf16.gmra.mxu0 %v1079
        %v1198 = vpop.f32.mrf.mxu0
        %v1199 = vadd.f32 0.0, %v1198
        %v1200 = vpop.f32.mrf.mxu0
        %v1201 = vpop.f32.mrf.mxu0
        %v1202 = vadd.f32 0.0, %v1201
        %v1203 = vpop.f32.mrf.mxu0
        %1204 = vmatprep.mubr.bf16.mxu0 0
        %1205 = vmatmul.mubr.bf16.gmra.mxu0 %v1082
        %v1206 = vpop.f32.mrf.mxu0
        %v1207 = vadd.f32 0.0, %v1206
        %v1208 = vpop.f32.mrf.mxu0
        %v1209 = vpop.f32.mrf.mxu0
        %v1210 = vadd.f32 0.0, %v1209
        %v1211 = vpop.f32.mrf.mxu0
        %1212 = vmatprep.mubr.bf16.mxu0 0
        %1213 = vmatmul.mubr.bf16.gmra.mxu0 %v1085
        %v1214 = vpop.f32.mrf.mxu0
        %v1215 = vadd.f32 0.0, %v1214
        %v1216 = vpop.f32.mrf.mxu0
        %v1217 = vpop.f32.mrf.mxu0
        %v1218 = vadd.f32 0.0, %v1217
        %v1219 = vpop.f32.mrf.mxu0
        %1220 = vmatprep.mubr.bf16.mxu0 0
        %1221 = vmatmul.mubr.bf16.gmra.mxu0 %v1088
        %v1222 = vpop.f32.mrf.mxu0
        %v1223 = vadd.f32 0.0, %v1222
        %v1224 = vpop.f32.mrf.mxu0
        %v1225 = vpop.f32.mrf.mxu0
        %v1226 = vadd.f32 0.0, %v1225
        %v1227 = vpop.f32.mrf.mxu0
        %1228 = vmatprep.mubr.bf16.mxu0 0
        %1229 = vmatmul.mubr.bf16.gmra.mxu0 %v1091
        %v1230 = vpop.f32.mrf.mxu0
        %v1231 = vadd.f32 0.0, %v1230
        %v1232 = vpop.f32.mrf.mxu0
        %v1233 = vpop.f32.mrf.mxu0
        %v1234 = vadd.f32 0.0, %v1233
        %v1235 = vpop.f32.mrf.mxu0
        %1236 = vmatprep.mubr.bf16.mxu0 0
        %1237 = vmatmul.mubr.bf16.gmra.mxu0 %v1094
        %v1238 = vpop.f32.mrf.mxu0
        %v1239 = vadd.f32 0.0, %v1238
        %v1240 = vpop.f32.mrf.mxu0
        %v1241 = vpop.f32.mrf.mxu0
        %v1242 = vadd.f32 0.0, %v1241
        %v1243 = vpop.f32.mrf.mxu0
        %1244 = vmatprep.mubr.bf16.mxu0 0
        %1245 = vmatmul.mubr.bf16.gmra.mxu0 %v1097
        %v1246 = vpop.f32.mrf.mxu0
        %v1247 = vadd.f32 0.0, %v1246
        %v1248 = vpop.f32.mrf.mxu0
        %v1249 = vpop.f32.mrf.mxu0
        %v1250 = vadd.f32 0.0, %v1249
        %v1251 = vpop.f32.mrf.mxu0
        %1252 = vmatprep.mubr.bf16.mxu0 0
        %1253 = vmatmul.mubr.bf16.gmra.mxu0 %v1100
        %v1254 = vpop.f32.mrf.mxu0
        %v1255 = vadd.f32 0.0, %v1254
        %v1256 = vpop.f32.mrf.mxu0
        %v1257 = vpop.f32.mrf.mxu0
        %v1258 = vadd.f32 0.0, %v1257
        %v1259 = vpop.f32.mrf.mxu0
        %1260 = vmatprep.mubr.bf16.mxu0 0
        %1261 = vmatmul.mubr.bf16.gmra.mxu0 %v1103
        %v1262 = vpop.f32.mrf.mxu0
        %v1263 = vadd.f32 0.0, %v1262
        %v1264 = vpop.f32.mrf.mxu0
        %v1265 = vpop.f32.mrf.mxu0
        %v1266 = vadd.f32 0.0, %v1265
        %v1267 = vpop.f32.mrf.mxu0
        %1268 = vdwg.mxu0
        %v1269 = vadd.f32 %v800, %v1143
        %v1270 = vadd.f32 %v803, %v1146
        %v1271 = vadd.f32 %v808, %v1151
        %v1272 = vadd.f32 %v811, %v1154
        %v1273 = vadd.f32 %v816, %v1159
        %v1274 = vadd.f32 %v819, %v1162
        %v1275 = vadd.f32 %v824, %v1167
        %v1276 = vadd.f32 %v827, %v1170
        %v1277 = vadd.f32 %v832, %v1175
        %v1278 = vadd.f32 %v835, %v1178
        %v1279 = vadd.f32 %v840, %v1183
        %v1280 = vadd.f32 %v843, %v1186
        %v1281 = vadd.f32 %v848, %v1191
        %v1282 = vadd.f32 %v851, %v1194
        %v1283 = vadd.f32 %v856, %v1199
        %v1284 = vadd.f32 %v859, %v1202
        %v1285 = vadd.f32 %v864, %v1207
        %v1286 = vadd.f32 %v867, %v1210
        %v1287 = vadd.f32 %v872, %v1215
        %v1288 = vadd.f32 %v875, %v1218
        %v1289 = vadd.f32 %v880, %v1223
        %v1290 = vadd.f32 %v883, %v1226
        %v1291 = vadd.f32 %v888, %v1231
        %v1292 = vadd.f32 %v891, %v1234
        %v1293 = vadd.f32 %v896, %v1239
        %v1294 = vadd.f32 %v899, %v1242
        %v1295 = vadd.f32 %v904, %v1247
        %v1296 = vadd.f32 %v907, %v1250
        %v1297 = vadd.f32 %v912, %v1255
        %v1298 = vadd.f32 %v915, %v1258
        %v1299 = vadd.f32 %v920, %v1263
        %v1300 = vadd.f32 %v923, %v1266
        %v1301 = vpack.c.bf16 %v299, %v298
        %s1302 = scalar_lea.vmem %s1, 6
        %v1303 = vld [vmem:[%s1302] sm:$0x3]
        %v1305 = vsel %vm500, %v1301, 0
        %v1308 = vsel %vm549, %v1303, 0
        %1310 = vmatprep.subr.bf16.mxu0 0
        %1311 = vmatpush1.bf16.msra.mxu0 0
        %1312 = vmatprep.subr.bf16.mxu0 0
        %1313 = vmatpush1.bf16.msra.mxu0 0
        %1314 = vmatprep.subr.bf16.mxu0 0
        %1315 = vmatpush1.bf16.msra.mxu0 0
        %1316 = vmatprep.subr.bf16.mxu0 0
        %1317 = vmatpush1.bf16.msra.mxu0 0
        %1318 = vmatprep.subr.bf16.mxu0 0
        %1319 = vmatpush1.bf16.msra.mxu0 0
        %1320 = vmatprep.subr.bf16.mxu0 0
        %1321 = vmatpush1.bf16.msra.mxu0 0
        %1322 = vmatprep.subr.bf16.mxu0 0
        %1323 = vmatpush1.bf16.msra.mxu0 0
        %1324 = vmatprep.subr.bf16.mxu0 0
        %1325 = vmatpush1.bf16.msra.mxu0 %v1308
        %1326 = vmatprep.subr.bf16.mxu0 0
        %1327 = vmatpush2.bf16.msra.mxu0 0
        %1328 = vmatprep.subr.bf16.mxu0 0
        %1329 = vmatpush2.bf16.msra.mxu0 0
        %1330 = vmatprep.subr.bf16.mxu0 0
        %1331 = vmatpush2.bf16.msra.mxu0 0
        %1332 = vmatprep.subr.bf16.mxu0 0
        %1333 = vmatpush2.bf16.msra.mxu0 0
        %1334 = vmatprep.subr.bf16.mxu0 0
        %1335 = vmatpush2.bf16.msra.mxu0 0
        %1336 = vmatprep.subr.bf16.mxu0 0
        %1337 = vmatpush2.bf16.msra.mxu0 0
        %1338 = vmatprep.subr.bf16.mxu0 0
        %1339 = vmatpush2.bf16.msra.mxu0 0
        %1340 = vmatprep.subr.bf16.mxu0 0
        %1341 = vmatpush2.bf16.msra.mxu0 0
        %1342 = vmatprep.mubr.bf16.mxu0 0
        %1343 = vmatmul.mubr.bf16.gmra.mxu0 %v718
        %v1344 = vpop.f32.mrf.mxu0
        %v1345 = vadd.f32 0.0, %v1344
        %v1346 = vpop.f32.mrf.mxu0
        %v1347 = vpop.f32.mrf.mxu0
        %v1348 = vadd.f32 0.0, %v1347
        %v1349 = vpop.f32.mrf.mxu0
        %1350 = vmatprep.mubr.bf16.mxu0 0
        %1351 = vmatmul.mubr.bf16.gmra.mxu0 %v721
        %v1352 = vpop.f32.mrf.mxu0
        %v1353 = vadd.f32 0.0, %v1352
        %v1354 = vpop.f32.mrf.mxu0
        %v1355 = vpop.f32.mrf.mxu0
        %v1356 = vadd.f32 0.0, %v1355
        %v1357 = vpop.f32.mrf.mxu0
        %1358 = vmatprep.mubr.bf16.mxu0 0
        %1359 = vmatmul.mubr.bf16.gmra.mxu0 %v724
        %v1360 = vpop.f32.mrf.mxu0
        %v1361 = vadd.f32 0.0, %v1360
        %v1362 = vpop.f32.mrf.mxu0
        %v1363 = vpop.f32.mrf.mxu0
        %v1364 = vadd.f32 0.0, %v1363
        %v1365 = vpop.f32.mrf.mxu0
        %1366 = vmatprep.mubr.bf16.mxu0 0
        %1367 = vmatmul.mubr.bf16.gmra.mxu0 %v727
        %v1368 = vpop.f32.mrf.mxu0
        %v1369 = vadd.f32 0.0, %v1368
        %v1370 = vpop.f32.mrf.mxu0
        %v1371 = vpop.f32.mrf.mxu0
        %v1372 = vadd.f32 0.0, %v1371
        %v1373 = vpop.f32.mrf.mxu0
        %1374 = vmatprep.mubr.bf16.mxu0 0
        %1375 = vmatmul.mubr.bf16.gmra.mxu0 %v730
        %v1376 = vpop.f32.mrf.mxu0
        %v1377 = vadd.f32 0.0, %v1376
        %v1378 = vpop.f32.mrf.mxu0
        %v1379 = vpop.f32.mrf.mxu0
        %v1380 = vadd.f32 0.0, %v1379
        %v1381 = vpop.f32.mrf.mxu0
        %1382 = vmatprep.mubr.bf16.mxu0 0
        %1383 = vmatmul.mubr.bf16.gmra.mxu0 %v733
        %v1384 = vpop.f32.mrf.mxu0
        %v1385 = vadd.f32 0.0, %v1384
        %v1386 = vpop.f32.mrf.mxu0
        %v1387 = vpop.f32.mrf.mxu0
        %v1388 = vadd.f32 0.0, %v1387
        %v1389 = vpop.f32.mrf.mxu0
        %1390 = vmatprep.mubr.bf16.mxu0 0
        %1391 = vmatmul.mubr.bf16.gmra.mxu0 %v736
        %v1392 = vpop.f32.mrf.mxu0
        %v1393 = vadd.f32 0.0, %v1392
        %v1394 = vpop.f32.mrf.mxu0
        %v1395 = vpop.f32.mrf.mxu0
        %v1396 = vadd.f32 0.0, %v1395
        %v1397 = vpop.f32.mrf.mxu0
        %1398 = vmatprep.mubr.bf16.mxu0 0
        %1399 = vmatmul.mubr.bf16.gmra.mxu0 %v739
        %v1400 = vpop.f32.mrf.mxu0
        %v1401 = vadd.f32 0.0, %v1400
        %v1402 = vpop.f32.mrf.mxu0
        %v1403 = vpop.f32.mrf.mxu0
        %v1404 = vadd.f32 0.0, %v1403
        %v1405 = vpop.f32.mrf.mxu0
        %1406 = vmatprep.mubr.bf16.mxu0 0
        %1407 = vmatmul.mubr.bf16.gmra.mxu0 %v742
        %v1408 = vpop.f32.mrf.mxu0
        %v1409 = vadd.f32 0.0, %v1408
        %v1410 = vpop.f32.mrf.mxu0
        %v1411 = vpop.f32.mrf.mxu0
        %v1412 = vadd.f32 0.0, %v1411
        %v1413 = vpop.f32.mrf.mxu0
        %1414 = vmatprep.mubr.bf16.mxu0 0
        %1415 = vmatmul.mubr.bf16.gmra.mxu0 %v745
        %v1416 = vpop.f32.mrf.mxu0
        %v1417 = vadd.f32 0.0, %v1416
        %v1418 = vpop.f32.mrf.mxu0
        %v1419 = vpop.f32.mrf.mxu0
        %v1420 = vadd.f32 0.0, %v1419
        %v1421 = vpop.f32.mrf.mxu0
        %1422 = vmatprep.mubr.bf16.mxu0 0
        %1423 = vmatmul.mubr.bf16.gmra.mxu0 %v748
        %v1424 = vpop.f32.mrf.mxu0
        %v1425 = vadd.f32 0.0, %v1424
        %v1426 = vpop.f32.mrf.mxu0
        %v1427 = vpop.f32.mrf.mxu0
        %v1428 = vadd.f32 0.0, %v1427
        %v1429 = vpop.f32.mrf.mxu0
        %1430 = vmatprep.mubr.bf16.mxu0 0
        %1431 = vmatmul.mubr.bf16.gmra.mxu0 %v751
        %v1432 = vpop.f32.mrf.mxu0
        %v1433 = vadd.f32 0.0, %v1432
        %v1434 = vpop.f32.mrf.mxu0
        %v1435 = vpop.f32.mrf.mxu0
        %v1436 = vadd.f32 0.0, %v1435
        %v1437 = vpop.f32.mrf.mxu0
        %1438 = vmatprep.mubr.bf16.mxu0 0
        %1439 = vmatmul.mubr.bf16.gmra.mxu0 %v754
        %v1440 = vpop.f32.mrf.mxu0
        %v1441 = vadd.f32 0.0, %v1440
        %v1442 = vpop.f32.mrf.mxu0
        %v1443 = vpop.f32.mrf.mxu0
        %v1444 = vadd.f32 0.0, %v1443
        %v1445 = vpop.f32.mrf.mxu0
        %1446 = vmatprep.mubr.bf16.mxu0 0
        %1447 = vmatmul.mubr.bf16.gmra.mxu0 %v757
        %v1448 = vpop.f32.mrf.mxu0
        %v1449 = vadd.f32 0.0, %v1448
        %v1450 = vpop.f32.mrf.mxu0
        %v1451 = vpop.f32.mrf.mxu0
        %v1452 = vadd.f32 0.0, %v1451
        %v1453 = vpop.f32.mrf.mxu0
        %1454 = vmatprep.mubr.bf16.mxu0 0
        %1455 = vmatmul.mubr.bf16.gmra.mxu0 %v760
        %v1456 = vpop.f32.mrf.mxu0
        %v1457 = vadd.f32 0.0, %v1456
        %v1458 = vpop.f32.mrf.mxu0
        %v1459 = vpop.f32.mrf.mxu0
        %v1460 = vadd.f32 0.0, %v1459
        %v1461 = vpop.f32.mrf.mxu0
        %1462 = vmatprep.mubr.bf16.mxu0 0
        %1463 = vmatmul.mubr.bf16.gmra.mxu0 %v1305
        %v1464 = vpop.f32.mrf.mxu0
        %v1465 = vadd.f32 0.0, %v1464
        %v1466 = vpop.f32.mrf.mxu0
        %v1467 = vpop.f32.mrf.mxu0
        %v1468 = vadd.f32 0.0, %v1467
        %v1469 = vpop.f32.mrf.mxu0
        %1470 = vdwg.mxu0
        %v1471 = vadd.f32 %v1269, %v1345
        %v1472 = vadd.f32 %v1270, %v1348
        %v1473 = vadd.f32 %v1271, %v1353
        %v1474 = vadd.f32 %v1272, %v1356
        %v1475 = vadd.f32 %v1273, %v1361
        %v1476 = vadd.f32 %v1274, %v1364
        %v1477 = vadd.f32 %v1275, %v1369
        %v1478 = vadd.f32 %v1276, %v1372
        %v1479 = vadd.f32 %v1277, %v1377
        %v1480 = vadd.f32 %v1278, %v1380
        %v1481 = vadd.f32 %v1279, %v1385
        %v1482 = vadd.f32 %v1280, %v1388
        %v1483 = vadd.f32 %v1281, %v1393
        %v1484 = vadd.f32 %v1282, %v1396
        %v1485 = vadd.f32 %v1283, %v1401
        %v1486 = vadd.f32 %v1284, %v1404
        %v1487 = vadd.f32 %v1285, %v1409
        %v1488 = vadd.f32 %v1286, %v1412
        %v1489 = vadd.f32 %v1287, %v1417
        %v1490 = vadd.f32 %v1288, %v1420
        %v1491 = vadd.f32 %v1289, %v1425
        %v1492 = vadd.f32 %v1290, %v1428
        %v1493 = vadd.f32 %v1291, %v1433
        %v1494 = vadd.f32 %v1292, %v1436
        %v1495 = vadd.f32 %v1293, %v1441
        %v1496 = vadd.f32 %v1294, %v1444
        %v1497 = vadd.f32 %v1295, %v1449
        %v1498 = vadd.f32 %v1296, %v1452
        %v1499 = vadd.f32 %v1297, %v1457
        %v1500 = vadd.f32 %v1298, %v1460
        %v1501 = vadd.f32 %v1299, %v1465
        %v1502 = vadd.f32 %v1300, %v1468
        %v1506 = vrot.slane %v298, 1
        %v1507 = vrot.slane %v299, 1
        %v1508 = vsel %vm369, %v1506, %v1507
        %v1509 = vrot.slane %v300, 1
        %v1510 = vsel %vm369, %v1507, %v1509
        %v1513 = vpack.c.bf16 %v1510, %v1508
        %s1514 = scalar_lea.vmem %s1, 8
        %v1515 = vld [vmem:[%s1514] sm:$0x3]
        %v1517 = vsel %vm500, %v1513, 0
        %v1520 = vsel %vm549, %v1515, 0
        %1522 = vmatprep.subr.bf16.mxu0 0
        %1523 = vmatpush1.bf16.msra.mxu0 0
        %1524 = vmatprep.subr.bf16.mxu0 0
        %1525 = vmatpush1.bf16.msra.mxu0 0
        %1526 = vmatprep.subr.bf16.mxu0 0
        %1527 = vmatpush1.bf16.msra.mxu0 0
        %1528 = vmatprep.subr.bf16.mxu0 0
        %1529 = vmatpush1.bf16.msra.mxu0 0
        %1530 = vmatprep.subr.bf16.mxu0 0
        %1531 = vmatpush1.bf16.msra.mxu0 0
        %1532 = vmatprep.subr.bf16.mxu0 0
        %1533 = vmatpush1.bf16.msra.mxu0 0
        %1534 = vmatprep.subr.bf16.mxu0 0
        %1535 = vmatpush1.bf16.msra.mxu0 0
        %1536 = vmatprep.subr.bf16.mxu0 0
        %1537 = vmatpush1.bf16.msra.mxu0 %v1520
        %1538 = vmatprep.subr.bf16.mxu0 0
        %1539 = vmatpush2.bf16.msra.mxu0 0
        %1540 = vmatprep.subr.bf16.mxu0 0
        %1541 = vmatpush2.bf16.msra.mxu0 0
        %1542 = vmatprep.subr.bf16.mxu0 0
        %1543 = vmatpush2.bf16.msra.mxu0 0
        %1544 = vmatprep.subr.bf16.mxu0 0
        %1545 = vmatpush2.bf16.msra.mxu0 0
        %1546 = vmatprep.subr.bf16.mxu0 0
        %1547 = vmatpush2.bf16.msra.mxu0 0
        %1548 = vmatprep.subr.bf16.mxu0 0
        %1549 = vmatpush2.bf16.msra.mxu0 0
        %1550 = vmatprep.subr.bf16.mxu0 0
        %1551 = vmatpush2.bf16.msra.mxu0 0
        %1552 = vmatprep.subr.bf16.mxu0 0
        %1553 = vmatpush2.bf16.msra.mxu0 0
        %1554 = vmatprep.mubr.bf16.mxu0 0
        %1555 = vmatmul.mubr.bf16.gmra.mxu0 %v505
        %v1556 = vpop.f32.mrf.mxu0
        %v1557 = vadd.f32 0.0, %v1556
        %v1558 = vpop.f32.mrf.mxu0
        %v1559 = vpop.f32.mrf.mxu0
        %v1560 = vadd.f32 0.0, %v1559
        %v1561 = vpop.f32.mrf.mxu0
        %1562 = vmatprep.mubr.bf16.mxu0 0
        %1563 = vmatmul.mubr.bf16.gmra.mxu0 %v508
        %v1564 = vpop.f32.mrf.mxu0
        %v1565 = vadd.f32 0.0, %v1564
        %v1566 = vpop.f32.mrf.mxu0
        %v1567 = vpop.f32.mrf.mxu0
        %v1568 = vadd.f32 0.0, %v1567
        %v1569 = vpop.f32.mrf.mxu0
        %1570 = vmatprep.mubr.bf16.mxu0 0
        %1571 = vmatmul.mubr.bf16.gmra.mxu0 %v511
        %v1572 = vpop.f32.mrf.mxu0
        %v1573 = vadd.f32 0.0, %v1572
        %v1574 = vpop.f32.mrf.mxu0
        %v1575 = vpop.f32.mrf.mxu0
        %v1576 = vadd.f32 0.0, %v1575
        %v1577 = vpop.f32.mrf.mxu0
        %1578 = vmatprep.mubr.bf16.mxu0 0
        %1579 = vmatmul.mubr.bf16.gmra.mxu0 %v514
        %v1580 = vpop.f32.mrf.mxu0
        %v1581 = vadd.f32 0.0, %v1580
        %v1582 = vpop.f32.mrf.mxu0
        %v1583 = vpop.f32.mrf.mxu0
        %v1584 = vadd.f32 0.0, %v1583
        %v1585 = vpop.f32.mrf.mxu0
        %1586 = vmatprep.mubr.bf16.mxu0 0
        %1587 = vmatmul.mubr.bf16.gmra.mxu0 %v517
        %v1588 = vpop.f32.mrf.mxu0
        %v1589 = vadd.f32 0.0, %v1588
        %v1590 = vpop.f32.mrf.mxu0
        %v1591 = vpop.f32.mrf.mxu0
        %v1592 = vadd.f32 0.0, %v1591
        %v1593 = vpop.f32.mrf.mxu0
        %1594 = vmatprep.mubr.bf16.mxu0 0
        %1595 = vmatmul.mubr.bf16.gmra.mxu0 %v520
        %v1596 = vpop.f32.mrf.mxu0
        %v1597 = vadd.f32 0.0, %v1596
        %v1598 = vpop.f32.mrf.mxu0
        %v1599 = vpop.f32.mrf.mxu0
        %v1600 = vadd.f32 0.0, %v1599
        %v1601 = vpop.f32.mrf.mxu0
        %1602 = vmatprep.mubr.bf16.mxu0 0
        %1603 = vmatmul.mubr.bf16.gmra.mxu0 %v523
        %v1604 = vpop.f32.mrf.mxu0
        %v1605 = vadd.f32 0.0, %v1604
        %v1606 = vpop.f32.mrf.mxu0
        %v1607 = vpop.f32.mrf.mxu0
        %v1608 = vadd.f32 0.0, %v1607
        %v1609 = vpop.f32.mrf.mxu0
        %1610 = vmatprep.mubr.bf16.mxu0 0
        %1611 = vmatmul.mubr.bf16.gmra.mxu0 %v526
        %v1612 = vpop.f32.mrf.mxu0
        %v1613 = vadd.f32 0.0, %v1612
        %v1614 = vpop.f32.mrf.mxu0
        %v1615 = vpop.f32.mrf.mxu0
        %v1616 = vadd.f32 0.0, %v1615
        %v1617 = vpop.f32.mrf.mxu0
        %1618 = vmatprep.mubr.bf16.mxu0 0
        %1619 = vmatmul.mubr.bf16.gmra.mxu0 %v529
        %v1620 = vpop.f32.mrf.mxu0
        %v1621 = vadd.f32 0.0, %v1620
        %v1622 = vpop.f32.mrf.mxu0
        %v1623 = vpop.f32.mrf.mxu0
        %v1624 = vadd.f32 0.0, %v1623
        %v1625 = vpop.f32.mrf.mxu0
        %1626 = vmatprep.mubr.bf16.mxu0 0
        %1627 = vmatmul.mubr.bf16.gmra.mxu0 %v532
        %v1628 = vpop.f32.mrf.mxu0
        %v1629 = vadd.f32 0.0, %v1628
        %v1630 = vpop.f32.mrf.mxu0
        %v1631 = vpop.f32.mrf.mxu0
        %v1632 = vadd.f32 0.0, %v1631
        %v1633 = vpop.f32.mrf.mxu0
        %1634 = vmatprep.mubr.bf16.mxu0 0
        %1635 = vmatmul.mubr.bf16.gmra.mxu0 %v535
        %v1636 = vpop.f32.mrf.mxu0
        %v1637 = vadd.f32 0.0, %v1636
        %v1638 = vpop.f32.mrf.mxu0
        %v1639 = vpop.f32.mrf.mxu0
        %v1640 = vadd.f32 0.0, %v1639
        %v1641 = vpop.f32.mrf.mxu0
        %1642 = vmatprep.mubr.bf16.mxu0 0
        %1643 = vmatmul.mubr.bf16.gmra.mxu0 %v538
        %v1644 = vpop.f32.mrf.mxu0
        %v1645 = vadd.f32 0.0, %v1644
        %v1646 = vpop.f32.mrf.mxu0
        %v1647 = vpop.f32.mrf.mxu0
        %v1648 = vadd.f32 0.0, %v1647
        %v1649 = vpop.f32.mrf.mxu0
        %1650 = vmatprep.mubr.bf16.mxu0 0
        %1651 = vmatmul.mubr.bf16.gmra.mxu0 %v541
        %v1652 = vpop.f32.mrf.mxu0
        %v1653 = vadd.f32 0.0, %v1652
        %v1654 = vpop.f32.mrf.mxu0
        %v1655 = vpop.f32.mrf.mxu0
        %v1656 = vadd.f32 0.0, %v1655
        %v1657 = vpop.f32.mrf.mxu0
        %1658 = vmatprep.mubr.bf16.mxu0 0
        %1659 = vmatmul.mubr.bf16.gmra.mxu0 %v544
        %v1660 = vpop.f32.mrf.mxu0
        %v1661 = vadd.f32 0.0, %v1660
        %v1662 = vpop.f32.mrf.mxu0
        %v1663 = vpop.f32.mrf.mxu0
        %v1664 = vadd.f32 0.0, %v1663
        %v1665 = vpop.f32.mrf.mxu0
        %1666 = vmatprep.mubr.bf16.mxu0 0
        %1667 = vmatmul.mubr.bf16.gmra.mxu0 %v547
        %v1668 = vpop.f32.mrf.mxu0
        %v1669 = vadd.f32 0.0, %v1668
        %v1670 = vpop.f32.mrf.mxu0
        %v1671 = vpop.f32.mrf.mxu0
        %v1672 = vadd.f32 0.0, %v1671
        %v1673 = vpop.f32.mrf.mxu0
        %1674 = vmatprep.mubr.bf16.mxu0 0
        %1675 = vmatmul.mubr.bf16.gmra.mxu0 %v1517
        %v1676 = vpop.f32.mrf.mxu0
        %v1677 = vadd.f32 0.0, %v1676
        %v1678 = vpop.f32.mrf.mxu0
        %v1679 = vpop.f32.mrf.mxu0
        %v1680 = vadd.f32 0.0, %v1679
        %v1681 = vpop.f32.mrf.mxu0
        %1682 = vdwg.mxu0
        %v1683 = vadd.f32 %v1471, %v1557
        %v1684 = vadd.f32 %v1472, %v1560
        %v1685 = vadd.f32 %v1473, %v1565
        %v1686 = vadd.f32 %v1474, %v1568
        %v1687 = vadd.f32 %v1475, %v1573
        %v1688 = vadd.f32 %v1476, %v1576
        %v1689 = vadd.f32 %v1477, %v1581
        %v1690 = vadd.f32 %v1478, %v1584
        %v1691 = vadd.f32 %v1479, %v1589
        %v1692 = vadd.f32 %v1480, %v1592
        %v1693 = vadd.f32 %v1481, %v1597
        %v1694 = vadd.f32 %v1482, %v1600
        %v1695 = vadd.f32 %v1483, %v1605
        %v1696 = vadd.f32 %v1484, %v1608
        %v1697 = vadd.f32 %v1485, %v1613
        %v1698 = vadd.f32 %v1486, %v1616
        %v1699 = vadd.f32 %v1487, %v1621
        %v1700 = vadd.f32 %v1488, %v1624
        %v1701 = vadd.f32 %v1489, %v1629
        %v1702 = vadd.f32 %v1490, %v1632
        %v1703 = vadd.f32 %v1491, %v1637
        %v1704 = vadd.f32 %v1492, %v1640
        %v1705 = vadd.f32 %v1493, %v1645
        %v1706 = vadd.f32 %v1494, %v1648
        %v1707 = vadd.f32 %v1495, %v1653
        %v1708 = vadd.f32 %v1496, %v1656
        %v1709 = vadd.f32 %v1497, %v1661
        %v1710 = vadd.f32 %v1498, %v1664
        %v1711 = vadd.f32 %v1499, %v1669
        %v1712 = vadd.f32 %v1500, %v1672
        %v1713 = vadd.f32 %v1501, %v1677
        %v1714 = vadd.f32 %v1502, %v1680
        %v1715 = vrot.slane %v298, 2
        %v1716 = vrot.slane %v299, 2
        %v1717 = vsel %vm926, %v1715, %v1716
        %v1718 = vrot.slane %v300, 2
        %v1719 = vsel %vm926, %v1716, %v1718
        %v1722 = vpack.c.bf16 %v1719, %v1717
        %s1723 = scalar_lea.vmem %s1, 10
        %v1724 = vld [vmem:[%s1723] sm:$0x3]
        %v1726 = vsel %vm500, %v1722, 0
        %v1729 = vsel %vm549, %v1724, 0
        %1731 = vmatprep.subr.bf16.mxu0 0
        %1732 = vmatpush1.bf16.msra.mxu0 0
        %1733 = vmatprep.subr.bf16.mxu0 0
        %1734 = vmatpush1.bf16.msra.mxu0 0
        %1735 = vmatprep.subr.bf16.mxu0 0
        %1736 = vmatpush1.bf16.msra.mxu0 0
        %1737 = vmatprep.subr.bf16.mxu0 0
        %1738 = vmatpush1.bf16.msra.mxu0 0
        %1739 = vmatprep.subr.bf16.mxu0 0
        %1740 = vmatpush1.bf16.msra.mxu0 0
        %1741 = vmatprep.subr.bf16.mxu0 0
        %1742 = vmatpush1.bf16.msra.mxu0 0
        %1743 = vmatprep.subr.bf16.mxu0 0
        %1744 = vmatpush1.bf16.msra.mxu0 0
        %1745 = vmatprep.subr.bf16.mxu0 0
        %1746 = vmatpush1.bf16.msra.mxu0 %v1729
        %1747 = vmatprep.subr.bf16.mxu0 0
        %1748 = vmatpush2.bf16.msra.mxu0 0
        %1749 = vmatprep.subr.bf16.mxu0 0
        %1750 = vmatpush2.bf16.msra.mxu0 0
        %1751 = vmatprep.subr.bf16.mxu0 0
        %1752 = vmatpush2.bf16.msra.mxu0 0
        %1753 = vmatprep.subr.bf16.mxu0 0
        %1754 = vmatpush2.bf16.msra.mxu0 0
        %1755 = vmatprep.subr.bf16.mxu0 0
        %1756 = vmatpush2.bf16.msra.mxu0 0
        %1757 = vmatprep.subr.bf16.mxu0 0
        %1758 = vmatpush2.bf16.msra.mxu0 0
        %1759 = vmatprep.subr.bf16.mxu0 0
        %1760 = vmatpush2.bf16.msra.mxu0 0
        %1761 = vmatprep.subr.bf16.mxu0 0
        %1762 = vmatpush2.bf16.msra.mxu0 0
        %1763 = vmatprep.mubr.bf16.mxu0 0
        %1764 = vmatmul.mubr.bf16.gmra.mxu0 %v1061
        %v1765 = vpop.f32.mrf.mxu0
        %v1766 = vadd.f32 0.0, %v1765
        %v1767 = vpop.f32.mrf.mxu0
        %v1768 = vpop.f32.mrf.mxu0
        %v1769 = vadd.f32 0.0, %v1768
        %v1770 = vpop.f32.mrf.mxu0
        %1771 = vmatprep.mubr.bf16.mxu0 0
        %1772 = vmatmul.mubr.bf16.gmra.mxu0 %v1064
        %v1773 = vpop.f32.mrf.mxu0
        %v1774 = vadd.f32 0.0, %v1773
        %v1775 = vpop.f32.mrf.mxu0
        %v1776 = vpop.f32.mrf.mxu0
        %v1777 = vadd.f32 0.0, %v1776
        %v1778 = vpop.f32.mrf.mxu0
        %1779 = vmatprep.mubr.bf16.mxu0 0
        %1780 = vmatmul.mubr.bf16.gmra.mxu0 %v1067
        %v1781 = vpop.f32.mrf.mxu0
        %v1782 = vadd.f32 0.0, %v1781
        %v1783 = vpop.f32.mrf.mxu0
        %v1784 = vpop.f32.mrf.mxu0
        %v1785 = vadd.f32 0.0, %v1784
        %v1786 = vpop.f32.mrf.mxu0
        %1787 = vmatprep.mubr.bf16.mxu0 0
        %1788 = vmatmul.mubr.bf16.gmra.mxu0 %v1070
        %v1789 = vpop.f32.mrf.mxu0
        %v1790 = vadd.f32 0.0, %v1789
        %v1791 = vpop.f32.mrf.mxu0
        %v1792 = vpop.f32.mrf.mxu0
        %v1793 = vadd.f32 0.0, %v1792
        %v1794 = vpop.f32.mrf.mxu0
        %1795 = vmatprep.mubr.bf16.mxu0 0
        %1796 = vmatmul.mubr.bf16.gmra.mxu0 %v1073
        %v1797 = vpop.f32.mrf.mxu0
        %v1798 = vadd.f32 0.0, %v1797
        %v1799 = vpop.f32.mrf.mxu0
        %v1800 = vpop.f32.mrf.mxu0
        %v1801 = vadd.f32 0.0, %v1800
        %v1802 = vpop.f32.mrf.mxu0
        %1803 = vmatprep.mubr.bf16.mxu0 0
        %1804 = vmatmul.mubr.bf16.gmra.mxu0 %v1076
        %v1805 = vpop.f32.mrf.mxu0
        %v1806 = vadd.f32 0.0, %v1805
        %v1807 = vpop.f32.mrf.mxu0
        %v1808 = vpop.f32.mrf.mxu0
        %v1809 = vadd.f32 0.0, %v1808
        %v1810 = vpop.f32.mrf.mxu0
        %1811 = vmatprep.mubr.bf16.mxu0 0
        %1812 = vmatmul.mubr.bf16.gmra.mxu0 %v1079
        %v1813 = vpop.f32.mrf.mxu0
        %v1814 = vadd.f32 0.0, %v1813
        %v1815 = vpop.f32.mrf.mxu0
        %v1816 = vpop.f32.mrf.mxu0
        %v1817 = vadd.f32 0.0, %v1816
        %v1818 = vpop.f32.mrf.mxu0
        %1819 = vmatprep.mubr.bf16.mxu0 0
        %1820 = vmatmul.mubr.bf16.gmra.mxu0 %v1082
        %v1821 = vpop.f32.mrf.mxu0
        %v1822 = vadd.f32 0.0, %v1821
        %v1823 = vpop.f32.mrf.mxu0
        %v1824 = vpop.f32.mrf.mxu0
        %v1825 = vadd.f32 0.0, %v1824
        %v1826 = vpop.f32.mrf.mxu0
        %1827 = vmatprep.mubr.bf16.mxu0 0
        %1828 = vmatmul.mubr.bf16.gmra.mxu0 %v1085
        %v1829 = vpop.f32.mrf.mxu0
        %v1830 = vadd.f32 0.0, %v1829
        %v1831 = vpop.f32.mrf.mxu0
        %v1832 = vpop.f32.mrf.mxu0
        %v1833 = vadd.f32 0.0, %v1832
        %v1834 = vpop.f32.mrf.mxu0
        %1835 = vmatprep.mubr.bf16.mxu0 0
        %1836 = vmatmul.mubr.bf16.gmra.mxu0 %v1088
        %v1837 = vpop.f32.mrf.mxu0
        %v1838 = vadd.f32 0.0, %v1837
        %v1839 = vpop.f32.mrf.mxu0
        %v1840 = vpop.f32.mrf.mxu0
        %v1841 = vadd.f32 0.0, %v1840
        %v1842 = vpop.f32.mrf.mxu0
        %1843 = vmatprep.mubr.bf16.mxu0 0
        %1844 = vmatmul.mubr.bf16.gmra.mxu0 %v1091
        %v1845 = vpop.f32.mrf.mxu0
        %v1846 = vadd.f32 0.0, %v1845
        %v1847 = vpop.f32.mrf.mxu0
        %v1848 = vpop.f32.mrf.mxu0
        %v1849 = vadd.f32 0.0, %v1848
        %v1850 = vpop.f32.mrf.mxu0
        %1851 = vmatprep.mubr.bf16.mxu0 0
        %1852 = vmatmul.mubr.bf16.gmra.mxu0 %v1094
        %v1853 = vpop.f32.mrf.mxu0
        %v1854 = vadd.f32 0.0, %v1853
        %v1855 = vpop.f32.mrf.mxu0
        %v1856 = vpop.f32.mrf.mxu0
        %v1857 = vadd.f32 0.0, %v1856
        %v1858 = vpop.f32.mrf.mxu0
        %1859 = vmatprep.mubr.bf16.mxu0 0
        %1860 = vmatmul.mubr.bf16.gmra.mxu0 %v1097
        %v1861 = vpop.f32.mrf.mxu0
        %v1862 = vadd.f32 0.0, %v1861
        %v1863 = vpop.f32.mrf.mxu0
        %v1864 = vpop.f32.mrf.mxu0
        %v1865 = vadd.f32 0.0, %v1864
        %v1866 = vpop.f32.mrf.mxu0
        %1867 = vmatprep.mubr.bf16.mxu0 0
        %1868 = vmatmul.mubr.bf16.gmra.mxu0 %v1100
        %v1869 = vpop.f32.mrf.mxu0
        %v1870 = vadd.f32 0.0, %v1869
        %v1871 = vpop.f32.mrf.mxu0
        %v1872 = vpop.f32.mrf.mxu0
        %v1873 = vadd.f32 0.0, %v1872
        %v1874 = vpop.f32.mrf.mxu0
        %1875 = vmatprep.mubr.bf16.mxu0 0
        %1876 = vmatmul.mubr.bf16.gmra.mxu0 %v1103
        %v1877 = vpop.f32.mrf.mxu0
        %v1878 = vadd.f32 0.0, %v1877
        %v1879 = vpop.f32.mrf.mxu0
        %v1880 = vpop.f32.mrf.mxu0
        %v1881 = vadd.f32 0.0, %v1880
        %v1882 = vpop.f32.mrf.mxu0
        %1883 = vmatprep.mubr.bf16.mxu0 0
        %1884 = vmatmul.mubr.bf16.gmra.mxu0 %v1726
        %v1885 = vpop.f32.mrf.mxu0
        %v1886 = vadd.f32 0.0, %v1885
        %v1887 = vpop.f32.mrf.mxu0
        %v1888 = vpop.f32.mrf.mxu0
        %v1889 = vadd.f32 0.0, %v1888
        %v1890 = vpop.f32.mrf.mxu0
        %1891 = vdwg.mxu0
        %v1892 = vadd.f32 %v1683, %v1766
        %v1893 = vadd.f32 %v1684, %v1769
        %v1894 = vadd.f32 %v1685, %v1774
        %v1895 = vadd.f32 %v1686, %v1777
        %v1896 = vadd.f32 %v1687, %v1782
        %v1897 = vadd.f32 %v1688, %v1785
        %v1898 = vadd.f32 %v1689, %v1790
        %v1899 = vadd.f32 %v1690, %v1793
        %v1900 = vadd.f32 %v1691, %v1798
        %v1901 = vadd.f32 %v1692, %v1801
        %v1902 = vadd.f32 %v1693, %v1806
        %v1903 = vadd.f32 %v1694, %v1809
        %v1904 = vadd.f32 %v1695, %v1814
        %v1905 = vadd.f32 %v1696, %v1817
        %v1906 = vadd.f32 %v1697, %v1822
        %v1907 = vadd.f32 %v1698, %v1825
        %v1908 = vadd.f32 %v1699, %v1830
        %v1909 = vadd.f32 %v1700, %v1833
        %v1910 = vadd.f32 %v1701, %v1838
        %v1911 = vadd.f32 %v1702, %v1841
        %v1912 = vadd.f32 %v1703, %v1846
        %v1913 = vadd.f32 %v1704, %v1849
        %v1914 = vadd.f32 %v1705, %v1854
        %v1915 = vadd.f32 %v1706, %v1857
        %v1916 = vadd.f32 %v1707, %v1862
        %v1917 = vadd.f32 %v1708, %v1865
        %v1918 = vadd.f32 %v1709, %v1870
        %v1919 = vadd.f32 %v1710, %v1873
        %v1920 = vadd.f32 %v1711, %v1878
        %v1921 = vadd.f32 %v1712, %v1881
        %v1922 = vadd.f32 %v1713, %v1886
        %v1923 = vadd.f32 %v1714, %v1889
        %v1924 = vpack.c.bf16 %v302, %v301
        %s1925 = scalar_lea.vmem %s1, 12
        %v1926 = vld [vmem:[%s1925] sm:$0x3]
        %v1928 = vsel %vm500, %v1924, 0
        %v1931 = vsel %vm549, %v1926, 0
        %1933 = vmatprep.subr.bf16.mxu0 0
        %1934 = vmatpush1.bf16.msra.mxu0 0
        %1935 = vmatprep.subr.bf16.mxu0 0
        %1936 = vmatpush1.bf16.msra.mxu0 0
        %1937 = vmatprep.subr.bf16.mxu0 0
        %1938 = vmatpush1.bf16.msra.mxu0 0
        %1939 = vmatprep.subr.bf16.mxu0 0
        %1940 = vmatpush1.bf16.msra.mxu0 0
        %1941 = vmatprep.subr.bf16.mxu0 0
        %1942 = vmatpush1.bf16.msra.mxu0 0
        %1943 = vmatprep.subr.bf16.mxu0 0
        %1944 = vmatpush1.bf16.msra.mxu0 0
        %1945 = vmatprep.subr.bf16.mxu0 0
        %1946 = vmatpush1.bf16.msra.mxu0 0
        %1947 = vmatprep.subr.bf16.mxu0 0
        %1948 = vmatpush1.bf16.msra.mxu0 %v1931
        %1949 = vmatprep.subr.bf16.mxu0 0
        %1950 = vmatpush2.bf16.msra.mxu0 0
        %1951 = vmatprep.subr.bf16.mxu0 0
        %1952 = vmatpush2.bf16.msra.mxu0 0
        %1953 = vmatprep.subr.bf16.mxu0 0
        %1954 = vmatpush2.bf16.msra.mxu0 0
        %1955 = vmatprep.subr.bf16.mxu0 0
        %1956 = vmatpush2.bf16.msra.mxu0 0
        %1957 = vmatprep.subr.bf16.mxu0 0
        %1958 = vmatpush2.bf16.msra.mxu0 0
        %1959 = vmatprep.subr.bf16.mxu0 0
        %1960 = vmatpush2.bf16.msra.mxu0 0
        %1961 = vmatprep.subr.bf16.mxu0 0
        %1962 = vmatpush2.bf16.msra.mxu0 0
        %1963 = vmatprep.subr.bf16.mxu0 0
        %1964 = vmatpush2.bf16.msra.mxu0 0
        %1965 = vmatprep.mubr.bf16.mxu0 0
        %1966 = vmatmul.mubr.bf16.gmra.mxu0 %v721
        %v1967 = vpop.f32.mrf.mxu0
        %v1968 = vadd.f32 0.0, %v1967
        %v1969 = vpop.f32.mrf.mxu0
        %v1970 = vpop.f32.mrf.mxu0
        %v1971 = vadd.f32 0.0, %v1970
        %v1972 = vpop.f32.mrf.mxu0
        %1973 = vmatprep.mubr.bf16.mxu0 0
        %1974 = vmatmul.mubr.bf16.gmra.mxu0 %v724
        %v1975 = vpop.f32.mrf.mxu0
        %v1976 = vadd.f32 0.0, %v1975
        %v1977 = vpop.f32.mrf.mxu0
        %v1978 = vpop.f32.mrf.mxu0
        %v1979 = vadd.f32 0.0, %v1978
        %v1980 = vpop.f32.mrf.mxu0
        %1981 = vmatprep.mubr.bf16.mxu0 0
        %1982 = vmatmul.mubr.bf16.gmra.mxu0 %v727
        %v1983 = vpop.f32.mrf.mxu0
        %v1984 = vadd.f32 0.0, %v1983
        %v1985 = vpop.f32.mrf.mxu0
        %v1986 = vpop.f32.mrf.mxu0
        %v1987 = vadd.f32 0.0, %v1986
        %v1988 = vpop.f32.mrf.mxu0
        %1989 = vmatprep.mubr.bf16.mxu0 0
        %1990 = vmatmul.mubr.bf16.gmra.mxu0 %v730
        %v1991 = vpop.f32.mrf.mxu0
        %v1992 = vadd.f32 0.0, %v1991
        %v1993 = vpop.f32.mrf.mxu0
        %v1994 = vpop.f32.mrf.mxu0
        %v1995 = vadd.f32 0.0, %v1994
        %v1996 = vpop.f32.mrf.mxu0
        %1997 = vmatprep.mubr.bf16.mxu0 0
        %1998 = vmatmul.mubr.bf16.gmra.mxu0 %v733
        %v1999 = vpop.f32.mrf.mxu0
        %v2000 = vadd.f32 0.0, %v1999
        %v2001 = vpop.f32.mrf.mxu0
        %v2002 = vpop.f32.mrf.mxu0
        %v2003 = vadd.f32 0.0, %v2002
        %v2004 = vpop.f32.mrf.mxu0
        %2005 = vmatprep.mubr.bf16.mxu0 0
        %2006 = vmatmul.mubr.bf16.gmra.mxu0 %v736
        %v2007 = vpop.f32.mrf.mxu0
        %v2008 = vadd.f32 0.0, %v2007
        %v2009 = vpop.f32.mrf.mxu0
        %v2010 = vpop.f32.mrf.mxu0
        %v2011 = vadd.f32 0.0, %v2010
        %v2012 = vpop.f32.mrf.mxu0
        %2013 = vmatprep.mubr.bf16.mxu0 0
        %2014 = vmatmul.mubr.bf16.gmra.mxu0 %v739
        %v2015 = vpop.f32.mrf.mxu0
        %v2016 = vadd.f32 0.0, %v2015
        %v2017 = vpop.f32.mrf.mxu0
        %v2018 = vpop.f32.mrf.mxu0
        %v2019 = vadd.f32 0.0, %v2018
        %v2020 = vpop.f32.mrf.mxu0
        %2021 = vmatprep.mubr.bf16.mxu0 0
        %2022 = vmatmul.mubr.bf16.gmra.mxu0 %v742
        %v2023 = vpop.f32.mrf.mxu0
        %v2024 = vadd.f32 0.0, %v2023
        %v2025 = vpop.f32.mrf.mxu0
        %v2026 = vpop.f32.mrf.mxu0
        %v2027 = vadd.f32 0.0, %v2026
        %v2028 = vpop.f32.mrf.mxu0
        %2029 = vmatprep.mubr.bf16.mxu0 0
        %2030 = vmatmul.mubr.bf16.gmra.mxu0 %v745
        %v2031 = vpop.f32.mrf.mxu0
        %v2032 = vadd.f32 0.0, %v2031
        %v2033 = vpop.f32.mrf.mxu0
        %v2034 = vpop.f32.mrf.mxu0
        %v2035 = vadd.f32 0.0, %v2034
        %v2036 = vpop.f32.mrf.mxu0
        %2037 = vmatprep.mubr.bf16.mxu0 0
        %2038 = vmatmul.mubr.bf16.gmra.mxu0 %v748
        %v2039 = vpop.f32.mrf.mxu0
        %v2040 = vadd.f32 0.0, %v2039
        %v2041 = vpop.f32.mrf.mxu0
        %v2042 = vpop.f32.mrf.mxu0
        %v2043 = vadd.f32 0.0, %v2042
        %v2044 = vpop.f32.mrf.mxu0
        %2045 = vmatprep.mubr.bf16.mxu0 0
        %2046 = vmatmul.mubr.bf16.gmra.mxu0 %v751
        %v2047 = vpop.f32.mrf.mxu0
        %v2048 = vadd.f32 0.0, %v2047
        %v2049 = vpop.f32.mrf.mxu0
        %v2050 = vpop.f32.mrf.mxu0
        %v2051 = vadd.f32 0.0, %v2050
        %v2052 = vpop.f32.mrf.mxu0
        %2053 = vmatprep.mubr.bf16.mxu0 0
        %2054 = vmatmul.mubr.bf16.gmra.mxu0 %v754
        %v2055 = vpop.f32.mrf.mxu0
        %v2056 = vadd.f32 0.0, %v2055
        %v2057 = vpop.f32.mrf.mxu0
        %v2058 = vpop.f32.mrf.mxu0
        %v2059 = vadd.f32 0.0, %v2058
        %v2060 = vpop.f32.mrf.mxu0
        %2061 = vmatprep.mubr.bf16.mxu0 0
        %2062 = vmatmul.mubr.bf16.gmra.mxu0 %v757
        %v2063 = vpop.f32.mrf.mxu0
        %v2064 = vadd.f32 0.0, %v2063
        %v2065 = vpop.f32.mrf.mxu0
        %v2066 = vpop.f32.mrf.mxu0
        %v2067 = vadd.f32 0.0, %v2066
        %v2068 = vpop.f32.mrf.mxu0
        %2069 = vmatprep.mubr.bf16.mxu0 0
        %2070 = vmatmul.mubr.bf16.gmra.mxu0 %v760
        %v2071 = vpop.f32.mrf.mxu0
        %v2072 = vadd.f32 0.0, %v2071
        %v2073 = vpop.f32.mrf.mxu0
        %v2074 = vpop.f32.mrf.mxu0
        %v2075 = vadd.f32 0.0, %v2074
        %v2076 = vpop.f32.mrf.mxu0
        %2077 = vmatprep.mubr.bf16.mxu0 0
        %2078 = vmatmul.mubr.bf16.gmra.mxu0 %v1305
        %v2079 = vpop.f32.mrf.mxu0
        %v2080 = vadd.f32 0.0, %v2079
        %v2081 = vpop.f32.mrf.mxu0
        %v2082 = vpop.f32.mrf.mxu0
        %v2083 = vadd.f32 0.0, %v2082
        %v2084 = vpop.f32.mrf.mxu0
        %2085 = vmatprep.mubr.bf16.mxu0 0
        %2086 = vmatmul.mubr.bf16.gmra.mxu0 %v1928
        %v2087 = vpop.f32.mrf.mxu0
        %v2088 = vadd.f32 0.0, %v2087
        %v2089 = vpop.f32.mrf.mxu0
        %v2090 = vpop.f32.mrf.mxu0
        %v2091 = vadd.f32 0.0, %v2090
        %v2092 = vpop.f32.mrf.mxu0
        %2093 = vdwg.mxu0
        %v2094 = vadd.f32 %v1892, %v1968
        %v2095 = vadd.f32 %v1893, %v1971
        %v2096 = vadd.f32 %v1894, %v1976
        %v2097 = vadd.f32 %v1895, %v1979
        %v2098 = vadd.f32 %v1896, %v1984
        %v2099 = vadd.f32 %v1897, %v1987
        %v2100 = vadd.f32 %v1898, %v1992
        %v2101 = vadd.f32 %v1899, %v1995
        %v2102 = vadd.f32 %v1900, %v2000
        %v2103 = vadd.f32 %v1901, %v2003
        %v2104 = vadd.f32 %v1902, %v2008
        %v2105 = vadd.f32 %v1903, %v2011
        %v2106 = vadd.f32 %v1904, %v2016
        %v2107 = vadd.f32 %v1905, %v2019
        %v2108 = vadd.f32 %v1906, %v2024
        %v2109 = vadd.f32 %v1907, %v2027
        %v2110 = vadd.f32 %v1908, %v2032
        %v2111 = vadd.f32 %v1909, %v2035
        %v2112 = vadd.f32 %v1910, %v2040
        %v2113 = vadd.f32 %v1911, %v2043
        %v2114 = vadd.f32 %v1912, %v2048
        %v2115 = vadd.f32 %v1913, %v2051
        %v2116 = vadd.f32 %v1914, %v2056
        %v2117 = vadd.f32 %v1915, %v2059
        %v2118 = vadd.f32 %v1916, %v2064
        %v2119 = vadd.f32 %v1917, %v2067
        %v2120 = vadd.f32 %v1918, %v2072
        %v2121 = vadd.f32 %v1919, %v2075
        %v2122 = vadd.f32 %v1920, %v2080
        %v2123 = vadd.f32 %v1921, %v2083
        %v2124 = vadd.f32 %v1922, %v2088
        %v2125 = vadd.f32 %v1923, %v2091
        %v2129 = vrot.slane %v301, 1
        %v2130 = vrot.slane %v302, 1
        %v2131 = vsel %vm369, %v2129, %v2130
        %v2132 = vrot.slane %v303, 1
        %v2133 = vsel %vm369, %v2130, %v2132
        %v2136 = vpack.c.bf16 %v2133, %v2131
        %s2137 = scalar_lea.vmem %s1, 14
        %v2138 = vld [vmem:[%s2137] sm:$0x3]
        %v2140 = vsel %vm500, %v2136, 0
        %v2143 = vsel %vm549, %v2138, 0
        %2145 = vmatprep.subr.bf16.mxu0 0
        %2146 = vmatpush1.bf16.msra.mxu0 0
        %2147 = vmatprep.subr.bf16.mxu0 0
        %2148 = vmatpush1.bf16.msra.mxu0 0
        %2149 = vmatprep.subr.bf16.mxu0 0
        %2150 = vmatpush1.bf16.msra.mxu0 0
        %2151 = vmatprep.subr.bf16.mxu0 0
        %2152 = vmatpush1.bf16.msra.mxu0 0
        %2153 = vmatprep.subr.bf16.mxu0 0
        %2154 = vmatpush1.bf16.msra.mxu0 0
        %2155 = vmatprep.subr.bf16.mxu0 0
        %2156 = vmatpush1.bf16.msra.mxu0 0
        %2157 = vmatprep.subr.bf16.mxu0 0
        %2158 = vmatpush1.bf16.msra.mxu0 0
        %2159 = vmatprep.subr.bf16.mxu0 0
        %2160 = vmatpush1.bf16.msra.mxu0 %v2143
        %2161 = vmatprep.subr.bf16.mxu0 0
        %2162 = vmatpush2.bf16.msra.mxu0 0
        %2163 = vmatprep.subr.bf16.mxu0 0
        %2164 = vmatpush2.bf16.msra.mxu0 0
        %2165 = vmatprep.subr.bf16.mxu0 0
        %2166 = vmatpush2.bf16.msra.mxu0 0
        %2167 = vmatprep.subr.bf16.mxu0 0
        %2168 = vmatpush2.bf16.msra.mxu0 0
        %2169 = vmatprep.subr.bf16.mxu0 0
        %2170 = vmatpush2.bf16.msra.mxu0 0
        %2171 = vmatprep.subr.bf16.mxu0 0
        %2172 = vmatpush2.bf16.msra.mxu0 0
        %2173 = vmatprep.subr.bf16.mxu0 0
        %2174 = vmatpush2.bf16.msra.mxu0 0
        %2175 = vmatprep.subr.bf16.mxu0 0
        %2176 = vmatpush2.bf16.msra.mxu0 0
        %2177 = vmatprep.mubr.bf16.mxu0 0
        %2178 = vmatmul.mubr.bf16.gmra.mxu0 %v508
        %v2179 = vpop.f32.mrf.mxu0
        %v2180 = vadd.f32 0.0, %v2179
        %v2181 = vpop.f32.mrf.mxu0
        %v2182 = vpop.f32.mrf.mxu0
        %v2183 = vadd.f32 0.0, %v2182
        %v2184 = vpop.f32.mrf.mxu0
        %2185 = vmatprep.mubr.bf16.mxu0 0
        %2186 = vmatmul.mubr.bf16.gmra.mxu0 %v511
        %v2187 = vpop.f32.mrf.mxu0
        %v2188 = vadd.f32 0.0, %v2187
        %v2189 = vpop.f32.mrf.mxu0
        %v2190 = vpop.f32.mrf.mxu0
        %v2191 = vadd.f32 0.0, %v2190
        %v2192 = vpop.f32.mrf.mxu0
        %2193 = vmatprep.mubr.bf16.mxu0 0
        %2194 = vmatmul.mubr.bf16.gmra.mxu0 %v514
        %v2195 = vpop.f32.mrf.mxu0
        %v2196 = vadd.f32 0.0, %v2195
        %v2197 = vpop.f32.mrf.mxu0
        %v2198 = vpop.f32.mrf.mxu0
        %v2199 = vadd.f32 0.0, %v2198
        %v2200 = vpop.f32.mrf.mxu0
        %2201 = vmatprep.mubr.bf16.mxu0 0
        %2202 = vmatmul.mubr.bf16.gmra.mxu0 %v517
        %v2203 = vpop.f32.mrf.mxu0
        %v2204 = vadd.f32 0.0, %v2203
        %v2205 = vpop.f32.mrf.mxu0
        %v2206 = vpop.f32.mrf.mxu0
        %v2207 = vadd.f32 0.0, %v2206
        %v2208 = vpop.f32.mrf.mxu0
        %2209 = vmatprep.mubr.bf16.mxu0 0
        %2210 = vmatmul.mubr.bf16.gmra.mxu0 %v520
        %v2211 = vpop.f32.mrf.mxu0
        %v2212 = vadd.f32 0.0, %v2211
        %v2213 = vpop.f32.mrf.mxu0
        %v2214 = vpop.f32.mrf.mxu0
        %v2215 = vadd.f32 0.0, %v2214
        %v2216 = vpop.f32.mrf.mxu0
        %2217 = vmatprep.mubr.bf16.mxu0 0
        %2218 = vmatmul.mubr.bf16.gmra.mxu0 %v523
        %v2219 = vpop.f32.mrf.mxu0
        %v2220 = vadd.f32 0.0, %v2219
        %v2221 = vpop.f32.mrf.mxu0
        %v2222 = vpop.f32.mrf.mxu0
        %v2223 = vadd.f32 0.0, %v2222
        %v2224 = vpop.f32.mrf.mxu0
        %2225 = vmatprep.mubr.bf16.mxu0 0
        %2226 = vmatmul.mubr.bf16.gmra.mxu0 %v526
        %v2227 = vpop.f32.mrf.mxu0
        %v2228 = vadd.f32 0.0, %v2227
        %v2229 = vpop.f32.mrf.mxu0
        %v2230 = vpop.f32.mrf.mxu0
        %v2231 = vadd.f32 0.0, %v2230
        %v2232 = vpop.f32.mrf.mxu0
        %2233 = vmatprep.mubr.bf16.mxu0 0
        %2234 = vmatmul.mubr.bf16.gmra.mxu0 %v529
        %v2235 = vpop.f32.mrf.mxu0
        %v2236 = vadd.f32 0.0, %v2235
        %v2237 = vpop.f32.mrf.mxu0
        %v2238 = vpop.f32.mrf.mxu0
        %v2239 = vadd.f32 0.0, %v2238
        %v2240 = vpop.f32.mrf.mxu0
        %2241 = vmatprep.mubr.bf16.mxu0 0
        %2242 = vmatmul.mubr.bf16.gmra.mxu0 %v532
        %v2243 = vpop.f32.mrf.mxu0
        %v2244 = vadd.f32 0.0, %v2243
        %v2245 = vpop.f32.mrf.mxu0
        %v2246 = vpop.f32.mrf.mxu0
        %v2247 = vadd.f32 0.0, %v2246
        %v2248 = vpop.f32.mrf.mxu0
        %2249 = vmatprep.mubr.bf16.mxu0 0
        %2250 = vmatmul.mubr.bf16.gmra.mxu0 %v535
        %v2251 = vpop.f32.mrf.mxu0
        %v2252 = vadd.f32 0.0, %v2251
        %v2253 = vpop.f32.mrf.mxu0
        %v2254 = vpop.f32.mrf.mxu0
        %v2255 = vadd.f32 0.0, %v2254
        %v2256 = vpop.f32.mrf.mxu0
        %2257 = vmatprep.mubr.bf16.mxu0 0
        %2258 = vmatmul.mubr.bf16.gmra.mxu0 %v538
        %v2259 = vpop.f32.mrf.mxu0
        %v2260 = vadd.f32 0.0, %v2259
        %v2261 = vpop.f32.mrf.mxu0
        %v2262 = vpop.f32.mrf.mxu0
        %v2263 = vadd.f32 0.0, %v2262
        %v2264 = vpop.f32.mrf.mxu0
        %2265 = vmatprep.mubr.bf16.mxu0 0
        %2266 = vmatmul.mubr.bf16.gmra.mxu0 %v541
        %v2267 = vpop.f32.mrf.mxu0
        %v2268 = vadd.f32 0.0, %v2267
        %v2269 = vpop.f32.mrf.mxu0
        %v2270 = vpop.f32.mrf.mxu0
        %v2271 = vadd.f32 0.0, %v2270
        %v2272 = vpop.f32.mrf.mxu0
        %2273 = vmatprep.mubr.bf16.mxu0 0
        %2274 = vmatmul.mubr.bf16.gmra.mxu0 %v544
        %v2275 = vpop.f32.mrf.mxu0
        %v2276 = vadd.f32 0.0, %v2275
        %v2277 = vpop.f32.mrf.mxu0
        %v2278 = vpop.f32.mrf.mxu0
        %v2279 = vadd.f32 0.0, %v2278
        %v2280 = vpop.f32.mrf.mxu0
        %2281 = vmatprep.mubr.bf16.mxu0 0
        %2282 = vmatmul.mubr.bf16.gmra.mxu0 %v547
        %v2283 = vpop.f32.mrf.mxu0
        %v2284 = vadd.f32 0.0, %v2283
        %v2285 = vpop.f32.mrf.mxu0
        %v2286 = vpop.f32.mrf.mxu0
        %v2287 = vadd.f32 0.0, %v2286
        %v2288 = vpop.f32.mrf.mxu0
        %2289 = vmatprep.mubr.bf16.mxu0 0
        %2290 = vmatmul.mubr.bf16.gmra.mxu0 %v1517
        %v2291 = vpop.f32.mrf.mxu0
        %v2292 = vadd.f32 0.0, %v2291
        %v2293 = vpop.f32.mrf.mxu0
        %v2294 = vpop.f32.mrf.mxu0
        %v2295 = vadd.f32 0.0, %v2294
        %v2296 = vpop.f32.mrf.mxu0
        %2297 = vmatprep.mubr.bf16.mxu0 0
        %2298 = vmatmul.mubr.bf16.gmra.mxu0 %v2140
        %v2299 = vpop.f32.mrf.mxu0
        %v2300 = vadd.f32 0.0, %v2299
        %v2301 = vpop.f32.mrf.mxu0
        %v2302 = vpop.f32.mrf.mxu0
        %v2303 = vadd.f32 0.0, %v2302
        %v2304 = vpop.f32.mrf.mxu0
        %2305 = vdwg.mxu0
        %v2306 = vadd.f32 %v2094, %v2180
        %v2307 = vadd.f32 %v2095, %v2183
        %v2308 = vadd.f32 %v2096, %v2188
        %v2309 = vadd.f32 %v2097, %v2191
        %v2310 = vadd.f32 %v2098, %v2196
        %v2311 = vadd.f32 %v2099, %v2199
        %v2312 = vadd.f32 %v2100, %v2204
        %v2313 = vadd.f32 %v2101, %v2207
        %v2314 = vadd.f32 %v2102, %v2212
        %v2315 = vadd.f32 %v2103, %v2215
        %v2316 = vadd.f32 %v2104, %v2220
        %v2317 = vadd.f32 %v2105, %v2223
        %v2318 = vadd.f32 %v2106, %v2228
        %v2319 = vadd.f32 %v2107, %v2231
        %v2320 = vadd.f32 %v2108, %v2236
        %v2321 = vadd.f32 %v2109, %v2239
        %v2322 = vadd.f32 %v2110, %v2244
        %v2323 = vadd.f32 %v2111, %v2247
        %v2324 = vadd.f32 %v2112, %v2252
        %v2325 = vadd.f32 %v2113, %v2255
        %v2326 = vadd.f32 %v2114, %v2260
        %v2327 = vadd.f32 %v2115, %v2263
        %v2328 = vadd.f32 %v2116, %v2268
        %v2329 = vadd.f32 %v2117, %v2271
        %v2330 = vadd.f32 %v2118, %v2276
        %v2331 = vadd.f32 %v2119, %v2279
        %v2332 = vadd.f32 %v2120, %v2284
        %v2333 = vadd.f32 %v2121, %v2287
        %v2334 = vadd.f32 %v2122, %v2292
        %v2335 = vadd.f32 %v2123, %v2295
        %v2336 = vadd.f32 %v2124, %v2300
        %v2337 = vadd.f32 %v2125, %v2303
        %v2338 = vrot.slane %v301, 2
        %v2339 = vrot.slane %v302, 2
        %v2340 = vsel %vm926, %v2338, %v2339
        %v2341 = vrot.slane %v303, 2
        %v2342 = vsel %vm926, %v2339, %v2341
        %v2345 = vpack.c.bf16 %v2342, %v2340
        %s2346 = scalar_lea.vmem %s1, 16
        %v2347 = vld [vmem:[%s2346] sm:$0x3]
        %v2349 = vsel %vm500, %v2345, 0
        %v2352 = vsel %vm549, %v2347, 0
        %2354 = vmatprep.subr.bf16.mxu0 0
        %2355 = vmatpush1.bf16.msra.mxu0 0
        %2356 = vmatprep.subr.bf16.mxu0 0
        %2357 = vmatpush1.bf16.msra.mxu0 0
        %2358 = vmatprep.subr.bf16.mxu0 0
        %2359 = vmatpush1.bf16.msra.mxu0 0
        %2360 = vmatprep.subr.bf16.mxu0 0
        %2361 = vmatpush1.bf16.msra.mxu0 0
        %2362 = vmatprep.subr.bf16.mxu0 0
        %2363 = vmatpush1.bf16.msra.mxu0 0
        %2364 = vmatprep.subr.bf16.mxu0 0
        %2365 = vmatpush1.bf16.msra.mxu0 0
        %2366 = vmatprep.subr.bf16.mxu0 0
        %2367 = vmatpush1.bf16.msra.mxu0 0
        %2368 = vmatprep.subr.bf16.mxu0 0
        %2369 = vmatpush1.bf16.msra.mxu0 %v2352
        %2370 = vmatprep.subr.bf16.mxu0 0
        %2371 = vmatpush2.bf16.msra.mxu0 0
        %2372 = vmatprep.subr.bf16.mxu0 0
        %2373 = vmatpush2.bf16.msra.mxu0 0
        %2374 = vmatprep.subr.bf16.mxu0 0
        %2375 = vmatpush2.bf16.msra.mxu0 0
        %2376 = vmatprep.subr.bf16.mxu0 0
        %2377 = vmatpush2.bf16.msra.mxu0 0
        %2378 = vmatprep.subr.bf16.mxu0 0
        %2379 = vmatpush2.bf16.msra.mxu0 0
        %2380 = vmatprep.subr.bf16.mxu0 0
        %2381 = vmatpush2.bf16.msra.mxu0 0
        %2382 = vmatprep.subr.bf16.mxu0 0
        %2383 = vmatpush2.bf16.msra.mxu0 0
        %2384 = vmatprep.subr.bf16.mxu0 0
        %2385 = vmatpush2.bf16.msra.mxu0 0
        %2386 = vmatprep.mubr.bf16.mxu0 0
        %2387 = vmatmul.mubr.bf16.gmra.mxu0 %v1064
        %v2388 = vpop.f32.mrf.mxu0
        %v2389 = vadd.f32 0.0, %v2388
        %v2390 = vpop.f32.mrf.mxu0
        %v2391 = vpop.f32.mrf.mxu0
        %v2392 = vadd.f32 0.0, %v2391
        %v2393 = vpop.f32.mrf.mxu0
        %2394 = vmatprep.mubr.bf16.mxu0 0
        %2395 = vmatmul.mubr.bf16.gmra.mxu0 %v1067
        %v2396 = vpop.f32.mrf.mxu0
        %v2397 = vadd.f32 0.0, %v2396
        %v2398 = vpop.f32.mrf.mxu0
        %v2399 = vpop.f32.mrf.mxu0
        %v2400 = vadd.f32 0.0, %v2399
        %v2401 = vpop.f32.mrf.mxu0
        %2402 = vmatprep.mubr.bf16.mxu0 0
        %2403 = vmatmul.mubr.bf16.gmra.mxu0 %v1070
        %v2404 = vpop.f32.mrf.mxu0
        %v2405 = vadd.f32 0.0, %v2404
        %v2406 = vpop.f32.mrf.mxu0
        %v2407 = vpop.f32.mrf.mxu0
        %v2408 = vadd.f32 0.0, %v2407
        %v2409 = vpop.f32.mrf.mxu0
        %2410 = vmatprep.mubr.bf16.mxu0 0
        %2411 = vmatmul.mubr.bf16.gmra.mxu0 %v1073
        %v2412 = vpop.f32.mrf.mxu0
        %v2413 = vadd.f32 0.0, %v2412
        %v2414 = vpop.f32.mrf.mxu0
        %v2415 = vpop.f32.mrf.mxu0
        %v2416 = vadd.f32 0.0, %v2415
        %v2417 = vpop.f32.mrf.mxu0
        %2418 = vmatprep.mubr.bf16.mxu0 0
        %2419 = vmatmul.mubr.bf16.gmra.mxu0 %v1076
        %v2420 = vpop.f32.mrf.mxu0
        %v2421 = vadd.f32 0.0, %v2420
        %v2422 = vpop.f32.mrf.mxu0
        %v2423 = vpop.f32.mrf.mxu0
        %v2424 = vadd.f32 0.0, %v2423
        %v2425 = vpop.f32.mrf.mxu0
        %2426 = vmatprep.mubr.bf16.mxu0 0
        %2427 = vmatmul.mubr.bf16.gmra.mxu0 %v1079
        %v2428 = vpop.f32.mrf.mxu0
        %v2429 = vadd.f32 0.0, %v2428
        %v2430 = vpop.f32.mrf.mxu0
        %v2431 = vpop.f32.mrf.mxu0
        %v2432 = vadd.f32 0.0, %v2431
        %v2433 = vpop.f32.mrf.mxu0
        %2434 = vmatprep.mubr.bf16.mxu0 0
        %2435 = vmatmul.mubr.bf16.gmra.mxu0 %v1082
        %v2436 = vpop.f32.mrf.mxu0
        %v2437 = vadd.f32 0.0, %v2436
        %v2438 = vpop.f32.mrf.mxu0
        %v2439 = vpop.f32.mrf.mxu0
        %v2440 = vadd.f32 0.0, %v2439
        %v2441 = vpop.f32.mrf.mxu0
        %2442 = vmatprep.mubr.bf16.mxu0 0
        %2443 = vmatmul.mubr.bf16.gmra.mxu0 %v1085
        %v2444 = vpop.f32.mrf.mxu0
        %v2445 = vadd.f32 0.0, %v2444
        %v2446 = vpop.f32.mrf.mxu0
        %v2447 = vpop.f32.mrf.mxu0
        %v2448 = vadd.f32 0.0, %v2447
        %v2449 = vpop.f32.mrf.mxu0
        %2450 = vmatprep.mubr.bf16.mxu0 0
        %2451 = vmatmul.mubr.bf16.gmra.mxu0 %v1088
        %v2452 = vpop.f32.mrf.mxu0
        %v2453 = vadd.f32 0.0, %v2452
        %v2454 = vpop.f32.mrf.mxu0
        %v2455 = vpop.f32.mrf.mxu0
        %v2456 = vadd.f32 0.0, %v2455
        %v2457 = vpop.f32.mrf.mxu0
        %2458 = vmatprep.mubr.bf16.mxu0 0
        %2459 = vmatmul.mubr.bf16.gmra.mxu0 %v1091
        %v2460 = vpop.f32.mrf.mxu0
        %v2461 = vadd.f32 0.0, %v2460
        %v2462 = vpop.f32.mrf.mxu0
        %v2463 = vpop.f32.mrf.mxu0
        %v2464 = vadd.f32 0.0, %v2463
        %v2465 = vpop.f32.mrf.mxu0
        %2466 = vmatprep.mubr.bf16.mxu0 0
        %2467 = vmatmul.mubr.bf16.gmra.mxu0 %v1094
        %v2468 = vpop.f32.mrf.mxu0
        %v2469 = vadd.f32 0.0, %v2468
        %v2470 = vpop.f32.mrf.mxu0
        %v2471 = vpop.f32.mrf.mxu0
        %v2472 = vadd.f32 0.0, %v2471
        %v2473 = vpop.f32.mrf.mxu0
        %2474 = vmatprep.mubr.bf16.mxu0 0
        %2475 = vmatmul.mubr.bf16.gmra.mxu0 %v1097
        %v2476 = vpop.f32.mrf.mxu0
        %v2477 = vadd.f32 0.0, %v2476
        %v2478 = vpop.f32.mrf.mxu0
        %v2479 = vpop.f32.mrf.mxu0
        %v2480 = vadd.f32 0.0, %v2479
        %v2481 = vpop.f32.mrf.mxu0
        %2482 = vmatprep.mubr.bf16.mxu0 0
        %2483 = vmatmul.mubr.bf16.gmra.mxu0 %v1100
        %v2484 = vpop.f32.mrf.mxu0
        %v2485 = vadd.f32 0.0, %v2484
        %v2486 = vpop.f32.mrf.mxu0
        %v2487 = vpop.f32.mrf.mxu0
        %v2488 = vadd.f32 0.0, %v2487
        %v2489 = vpop.f32.mrf.mxu0
        %2490 = vmatprep.mubr.bf16.mxu0 0
        %2491 = vmatmul.mubr.bf16.gmra.mxu0 %v1103
        %v2492 = vpop.f32.mrf.mxu0
        %v2493 = vadd.f32 0.0, %v2492
        %v2494 = vpop.f32.mrf.mxu0
        %v2495 = vpop.f32.mrf.mxu0
        %v2496 = vadd.f32 0.0, %v2495
        %v2497 = vpop.f32.mrf.mxu0
        %2498 = vmatprep.mubr.bf16.mxu0 0
        %2499 = vmatmul.mubr.bf16.gmra.mxu0 %v1726
        %v2500 = vpop.f32.mrf.mxu0
        %v2501 = vadd.f32 0.0, %v2500
        %v2502 = vpop.f32.mrf.mxu0
        %v2503 = vpop.f32.mrf.mxu0
        %v2504 = vadd.f32 0.0, %v2503
        %v2505 = vpop.f32.mrf.mxu0
        %2506 = vmatprep.mubr.bf16.mxu0 0
        %2507 = vmatmul.mubr.bf16.gmra.mxu0 %v2349
        %v2508 = vpop.f32.mrf.mxu0
        %v2509 = vadd.f32 0.0, %v2508
        %v2510 = vpop.f32.mrf.mxu0
        %v2511 = vpop.f32.mrf.mxu0
        %v2512 = vadd.f32 0.0, %v2511
        %v2513 = vpop.f32.mrf.mxu0
        %2514 = vdwg.mxu0
        %v2515 = vadd.f32 %v2306, %v2389
        %v2516 = vadd.f32 %v2307, %v2392
        %v2517 = vadd.f32 %v2308, %v2397
        %v2518 = vadd.f32 %v2309, %v2400
        %v2519 = vadd.f32 %v2310, %v2405
        %v2520 = vadd.f32 %v2311, %v2408
        %v2521 = vadd.f32 %v2312, %v2413
        %v2522 = vadd.f32 %v2313, %v2416
        %v2523 = vadd.f32 %v2314, %v2421
        %v2524 = vadd.f32 %v2315, %v2424
        %v2525 = vadd.f32 %v2316, %v2429
        %v2526 = vadd.f32 %v2317, %v2432
        %v2527 = vadd.f32 %v2318, %v2437
        %v2528 = vadd.f32 %v2319, %v2440
        %v2529 = vadd.f32 %v2320, %v2445
        %v2530 = vadd.f32 %v2321, %v2448
        %v2531 = vadd.f32 %v2322, %v2453
        %v2532 = vadd.f32 %v2323, %v2456
        %v2533 = vadd.f32 %v2324, %v2461
        %v2534 = vadd.f32 %v2325, %v2464
        %v2535 = vadd.f32 %v2326, %v2469
        %v2536 = vadd.f32 %v2327, %v2472
        %v2537 = vadd.f32 %v2328, %v2477
        %v2538 = vadd.f32 %v2329, %v2480
        %v2539 = vadd.f32 %v2330, %v2485
        %v2540 = vadd.f32 %v2331, %v2488
        %v2541 = vadd.f32 %v2332, %v2493
        %v2542 = vadd.f32 %v2333, %v2496
        %v2543 = vadd.f32 %v2334, %v2501
        %v2544 = vadd.f32 %v2335, %v2504
        %v2545 = vadd.f32 %v2336, %v2509
        %v2546 = vadd.f32 %v2337, %v2512
        %v2547 = vld [vmem:[%s2] sm:$0x1]
        %v2548 = vlaneseq
        %v2549 = vshrl.u32 %v2548, 7
        %v2550 = vsub.s32 0, %v2549
        %v2551 = vrot.slane %v2547, %v2550
        %v2552 = vadd.f32 %v2515, %v2551
        %v2553 = vadd.f32 %v2516, %v2551
        %v2554 = vadd.f32 %v2517, %v2551
        %v2555 = vadd.f32 %v2518, %v2551
        %v2556 = vadd.f32 %v2519, %v2551
        %v2557 = vadd.f32 %v2520, %v2551
        %v2558 = vadd.f32 %v2521, %v2551
        %v2559 = vadd.f32 %v2522, %v2551
        %v2560 = vadd.f32 %v2523, %v2551
        %v2561 = vadd.f32 %v2524, %v2551
        %v2562 = vadd.f32 %v2525, %v2551
        %v2563 = vadd.f32 %v2526, %v2551
        %v2564 = vadd.f32 %v2527, %v2551
        %v2565 = vadd.f32 %v2528, %v2551
        %v2566 = vadd.f32 %v2529, %v2551
        %v2567 = vadd.f32 %v2530, %v2551
        %v2568 = vadd.f32 %v2531, %v2551
        %v2569 = vadd.f32 %v2532, %v2551
        %v2570 = vadd.f32 %v2533, %v2551
        %v2571 = vadd.f32 %v2534, %v2551
        %v2572 = vadd.f32 %v2535, %v2551
        %v2573 = vadd.f32 %v2536, %v2551
        %v2574 = vadd.f32 %v2537, %v2551
        %v2575 = vadd.f32 %v2538, %v2551
        %v2576 = vadd.f32 %v2539, %v2551
        %v2577 = vadd.f32 %v2540, %v2551
        %v2578 = vadd.f32 %v2541, %v2551
        %v2579 = vadd.f32 %v2542, %v2551
        %v2580 = vadd.f32 %v2543, %v2551
        %v2581 = vadd.f32 %v2544, %v2551
        %v2582 = vadd.f32 %v2545, %v2551
        %v2583 = vadd.f32 %v2546, %v2551
        %v2584 = vmax.f32 %v2552, 0.0
        %v2585 = vmax.f32 %v2553, 0.0
        %v2586 = vmax.f32 %v2554, 0.0
        %v2587 = vmax.f32 %v2555, 0.0
        %v2588 = vmax.f32 %v2556, 0.0
        %v2589 = vmax.f32 %v2557, 0.0
        %v2590 = vmax.f32 %v2558, 0.0
        %v2591 = vmax.f32 %v2559, 0.0
        %v2592 = vmax.f32 %v2560, 0.0
        %v2593 = vmax.f32 %v2561, 0.0
        %v2594 = vmax.f32 %v2562, 0.0
        %v2595 = vmax.f32 %v2563, 0.0
        %v2596 = vmax.f32 %v2564, 0.0
        %v2597 = vmax.f32 %v2565, 0.0
        %v2598 = vmax.f32 %v2566, 0.0
        %v2599 = vmax.f32 %v2567, 0.0
        %v2600 = vmax.f32 %v2568, 0.0
        %v2601 = vmax.f32 %v2569, 0.0
        %v2602 = vmax.f32 %v2570, 0.0
        %v2603 = vmax.f32 %v2571, 0.0
        %v2604 = vmax.f32 %v2572, 0.0
        %v2605 = vmax.f32 %v2573, 0.0
        %v2606 = vmax.f32 %v2574, 0.0
        %v2607 = vmax.f32 %v2575, 0.0
        %v2608 = vmax.f32 %v2576, 0.0
        %v2609 = vmax.f32 %v2577, 0.0
        %v2610 = vmax.f32 %v2578, 0.0
        %v2611 = vmax.f32 %v2579, 0.0
        %v2612 = vmax.f32 %v2580, 0.0
        %v2613 = vmax.f32 %v2581, 0.0
        %v2614 = vmax.f32 %v2582, 0.0
        %v2615 = vmax.f32 %v2583, 0.0
        %v2616 = vadd.f32 %v2584, %v2585
        %v2617 = vadd.f32 %v2616, %v2586
        %v2618 = vadd.f32 %v2617, %v2587
        %v2619 = vadd.f32 %v2618, %v2588
        %v2620 = vadd.f32 %v2619, %v2589
        %v2621 = vadd.f32 %v2620, %v2590
        %v2622 = vadd.f32 %v2621, %v2591
        %v2623 = vadd.f32 %v2622, %v2592
        %v2624 = vadd.f32 %v2623, %v2593
        %v2625 = vadd.f32 %v2624, %v2594
        %v2626 = vadd.f32 %v2625, %v2595
        %v2627 = vadd.f32 %v2626, %v2596
        %v2628 = vadd.f32 %v2627, %v2597
        %v2629 = vadd.f32 %v2628, %v2598
        %v2630 = vadd.f32 %v2629, %v2599
        %v2631 = vadd.f32 %v2630, %v2600
        %v2632 = vadd.f32 %v2631, %v2601
        %v2633 = vadd.f32 %v2632, %v2602
        %v2634 = vadd.f32 %v2633, %v2603
        %v2635 = vadd.f32 %v2634, %v2604
        %v2636 = vadd.f32 %v2635, %v2605
        %v2637 = vadd.f32 %v2636, %v2606
        %v2638 = vadd.f32 %v2637, %v2607
        %v2639 = vadd.f32 %v2638, %v2608
        %v2640 = vadd.f32 %v2639, %v2609
        %v2641 = vadd.f32 %v2640, %v2610
        %v2642 = vadd.f32 %v2641, %v2611
        %v2643 = vadd.f32 %v2642, %v2612
        %v2644 = vadd.f32 %v2643, %v2613
        %v2645 = vadd.f32 %v2644, %v2614
        %v2646 = vadd.f32 %v2645, %v2615
        %v2647 = vrot.slane %v2646, 4
        %v2648 = vadd.f32 %v2646, %v2647
        %v2649 = vrot.slane %v2648, 2
        %v2650 = vadd.f32 %v2648, %v2649
        %v2651 = vrot.slane %v2650, 1
        %v2652 = vadd.f32 %v2650, %v2651
        %v2653 = vrcp.pop 256.0
        %v2654 = vmul.f32 %v2652, %v2653
        %v2655 = vpack.c.bf16 %v2654, %v2654
        %v2656 = vld [vmem:[%s3] sm:$0xf]
        %v2657 = vld [vmem:[%s3 + $0x4] sm:$0xf]
        %v2658 = vld [vmem:[%s3 + $0x8] sm:$0xf]
        %v2659 = vld [vmem:[%s3 + $0xc] sm:$0xf]
        %v2660 = vld [vmem:[%s3 + $0x10] sm:$0xf]
        %v2661 = vld [vmem:[%s3 + $0x14] sm:$0xf]
        %v2662 = vld [vmem:[%s3 + $0x18] sm:$0xf]
        %v2663 = vld [vmem:[%s3 + $0x1c] sm:$0xf]
        %v2664 = vld [vmem:[%s3 + $0x20] sm:$0xf]
        %v2665 = vld [vmem:[%s3 + $0x24] sm:$0xf]
        %v2666 = vld [vmem:[%s3 + $0x28] sm:$0xf]
        %v2667 = vld [vmem:[%s3 + $0x2c] sm:$0xf]
        %v2668 = vld [vmem:[%s3 + $0x30] sm:$0xf]
        %v2669 = vld [vmem:[%s3 + $0x34] sm:$0xf]
        %v2670 = vld [vmem:[%s3 + $0x38] sm:$0xf]
        %v2671 = vld [vmem:[%s3 + $0x3c] sm:$0xf]
        %v2672 = vld [vmem:[%s2 + $0x1] sm:$0x1]
        %v2689 = vunpack.c.l.b16 %v2656
        %v2690 = vunpack.c.l.b16 %v2657
        %v2691 = vunpack.c.l.b16 %v2658
        %v2692 = vunpack.c.l.b16 %v2659
        %v2693 = vunpack.c.l.b16 %v2660
        %v2694 = vunpack.c.l.b16 %v2661
        %v2695 = vunpack.c.l.b16 %v2662
        %v2696 = vunpack.c.l.b16 %v2663
        %v2697 = vunpack.c.l.b16 %v2664
        %v2698 = vunpack.c.l.b16 %v2665
        %v2699 = vunpack.c.l.b16 %v2666
        %v2700 = vunpack.c.l.b16 %v2667
        %v2701 = vunpack.c.l.b16 %v2668
        %v2702 = vunpack.c.l.b16 %v2669
        %v2703 = vunpack.c.l.b16 %v2670
        %v2704 = vunpack.c.l.b16 %v2671
        %v2705 = vpack.c.b16 %v2690, %v2689
        %v2706 = vpack.c.b16 %v2692, %v2691
        %v2707 = vpack.c.b16 %v2694, %v2693
        %v2708 = vpack.c.b16 %v2696, %v2695
        %v2709 = vpack.c.b16 %v2698, %v2697
        %v2710 = vpack.c.b16 %v2700, %v2699
        %v2711 = vpack.c.b16 %v2702, %v2701
        %v2712 = vpack.c.b16 %v2704, %v2703
        %2721 = vmatprep.subr.bf16.mxu0 0
        %2722 = vmatpush1.bf16.msra.mxu0 %v2712
        %2723 = vmatprep.subr.bf16.mxu0 0
        %2724 = vmatpush1.bf16.msra.mxu0 %v2711
        %2725 = vmatprep.subr.bf16.mxu0 0
        %2726 = vmatpush1.bf16.msra.mxu0 %v2710
        %2727 = vmatprep.subr.bf16.mxu0 0
        %2728 = vmatpush1.bf16.msra.mxu0 %v2709
        %2729 = vmatprep.subr.bf16.mxu0 0
        %2730 = vmatpush1.bf16.msra.mxu0 %v2708
        %2731 = vmatprep.subr.bf16.mxu0 0
        %2732 = vmatpush1.bf16.msra.mxu0 %v2707
        %2733 = vmatprep.subr.bf16.mxu0 0
        %2734 = vmatpush1.bf16.msra.mxu0 %v2706
        %2735 = vmatprep.subr.bf16.mxu0 0
        %2736 = vmatpush1.bf16.msra.mxu0 %v2705
        %2737 = vmatprep.subr.bf16.mxu0 0
        %2738 = vmatpush2.bf16.msra.mxu0 0
        %2739 = vmatprep.subr.bf16.mxu0 0
        %2740 = vmatpush2.bf16.msra.mxu0 0
        %2741 = vmatprep.subr.bf16.mxu0 0
        %2742 = vmatpush2.bf16.msra.mxu0 0
        %2743 = vmatprep.subr.bf16.mxu0 0
        %2744 = vmatpush2.bf16.msra.mxu0 0
        %2745 = vmatprep.subr.bf16.mxu0 0
        %2746 = vmatpush2.bf16.msra.mxu0 0
        %2747 = vmatprep.subr.bf16.mxu0 0
        %2748 = vmatpush2.bf16.msra.mxu0 0
        %2749 = vmatprep.subr.bf16.mxu0 0
        %2750 = vmatpush2.bf16.msra.mxu0 0
        %2751 = vmatprep.subr.bf16.mxu0 0
        %2752 = vmatpush2.bf16.msra.mxu0 0
        %2753 = vmatprep.mubr.bf16.mxu0 0
        %2754 = vmatmul.mubr.bf16.gmra.mxu0 %v2655
        %v2755 = vpop.f32.mrf.mxu0
        %v2756 = vadd.f32 %v2672, %v2755
        %v2757 = vpop.f32.mrf.mxu0
        %v2758 = vpop.f32.mrf.mxu0
        %v2759 = vpop.f32.mrf.mxu0
        %2760 = vdwg.mxu0
        %2761 = vst [vmem:[%s189] sm:$0x1] %v2756
        %s2762 = sand.u32 %s115, 1
        %s2763 = scalar_lea.sflag [#allocation3], %s2762
        %s2764 = sand.u32 %s115, 1
        %s2765 = scalar_lea.vmem [#allocation2], %s2764
        // Predicated region
        $region37: #{tpu_custom_call.1} parent=35 // pred_check
          %p2766 = pneg %p125
        $region38: #{tpu_custom_call.1} parent=35 // pred_check_branch
          %2768 = sbr.rel (%p2766) target = $region40
        $region39: #{tpu_custom_call.1} parent=35 // pred_region
          %s2770 = ssub.s32 16, 16
          %2771 = vsyncadd %s2763, %s2770
          %s2772 = smul.addr %s18, 16
          %s2773 = scalar_lea.hbm %s4, %s2772
          %s2775 = sshll.u32 %s2765, 4
          %s2776 = int_to_ptr.vmem [resolvable:$true] %s2775
          %2778 = dma.vmem_to_hbm [thread:$0]  %s2776, 16, %s2773, %s2763
        $region40: #{tpu_custom_call.1} parent=35 // pred_fallthru
          _
      $region36: #{tpu_custom_call.1} parent=5 // pred_fallthru
        _
      %p2779 = scmp.le.s32.totalorder 2, %s13
      // Predicated region
      $region41: #{tpu_custom_call.1} parent=5 // pred_check
        %p2780 = pneg %p2779
      $region42: #{tpu_custom_call.1} parent=5 // pred_check_branch
        %2782 = sbr.rel (%p2780) target = $region44
      $region43: #{tpu_custom_call.1} parent=5 // pred_region
        %s2783 = ssub.s32 %s13, 2
        // Predicated region
        $region45: #{tpu_custom_call.1} parent=43 // pred_check
          %p2784 = pneg %p131
        $region46: #{tpu_custom_call.1} parent=43 // pred_check_branch
          %2786 = sbr.rel (%p2784) target = $region48
        $region47: #{tpu_custom_call.1} parent=43 // pred_region
          %s2787 = sand.u32 %s116, 1
          %s2788 = scalar_lea.sflag [#allocation3], %s2787
          %s2789 = sand.u32 %s116, 1
          %s2790 = scalar_lea.vmem [#allocation2], %s2789
          %2791 = dma.done %s2788, 16
        $region48: #{tpu_custom_call.1} parent=43 // pred_fallthru
          _
      $region44: #{tpu_custom_call.1} parent=5 // pred_fallthru
        _
    $region6: #{tpu_custom_call.1} parent=1 // loop_footer
      %s17 = sadd.s32 1, %s13
    $region7: #{tpu_custom_call.1} parent=1 // loop_footer_branch
      %12 = sbr.rel target = $region3
    $region8: #{tpu_custom_call.1} parent=1 // loop_exit
      _
    %2792 = vsyncpa [#allocation3], 1
    %s2793 = scalar_lea.sflag [#allocation3], 1
    %2794 = vsyncpa %s2793, 1

</llo_original>
